<compile_context>
chip_gen: v6e
topology: v6e:2x2x1
jax: 0.10.0
libtpu: 0.0.40
codegen_flags: <defaults>
</compile_context>

<pallas_src>
import functools

import jax
import jax.numpy as jnp
from jax import lax
from jax.experimental import pallas as pl
from jax.experimental.pallas import tpu as pltpu

BN_EPS = 1e-5


def _down_block_kernel(patches1_ref, wf_ref, bf_ref, w2_ref, b2_ref,
                       gamma_ref, beta_ref, out_ref, pad_mid,
                       *, N, Hp, Wp, Cout):
    R = Hp * Wp
    M = N * R

    # ---- conv1 + residual conv fused into ONE MXU matmul over the precomputed im2col patches.
    # Column order of wf/bf is [conv1 | res_conv] so h1 (the hot consumer) sits at lane offset 0.
    y = jnp.dot(patches1_ref[...], wf_ref[...],
                preferred_element_type=jnp.float32) + bf_ref[...]        # (M, 2*Cout) f32
    h1 = y[:, :Cout]
    res = y[:, Cout:]

    # ---- conv2: scatter h1 into a zero-padded scratch image, build the im2col patch matrix
    # as a value (single bf16 cast), run the second MXU matmul. The buffer zero and interior
    # store each happen exactly once (single grid invocation).
    pad_mid[...] = jnp.zeros_like(pad_mid)
    pad_mid[:, 1:Hp + 1, 1:Wp + 1, :] = h1.reshape(N, Hp, Wp, Cout)

    cols = []
    for dy in range(3):
        for dx in range(3):
            cols.append(pad_mid[:, dy:dy + Hp, dx:dx + Wp, :].reshape(M, Cout))
    patches2 = jnp.concatenate(cols, axis=-1).astype(jnp.bfloat16)       # (M, 9*Cout) bf16

    h2 = jnp.dot(patches2, w2_ref[...],
                 preferred_element_type=jnp.float32) + b2_ref[...]       # (M, Cout) f32

    # ---- training-mode BatchNorm over the whole batch (biased variance, centered two-pass
    # formulation for numerical stability) + ReLU + residual add, all in VMEM.
    # TODO(synk): running_mean/running_var buffer updates of nn.BatchNorm2d are not modeled
    # (stateless training-mode forward only).
    inv_n = jnp.float32(1.0 / M)
    mean = jnp.sum(h2, axis=0, keepdims=True) * inv_n                    # (1, Cout)
    centered = h2 - mean
    var = jnp.sum(centered * centered, axis=0, keepdims=True) * inv_n    # biased variance
    scale = gamma_ref[...] * lax.rsqrt(var + BN_EPS)
    bn = centered * scale + beta_ref[...]
    out_ref[...] = res + jnp.maximum(bn, 0.0)


def init_params(key, in_channel, output_channel):
    """Deterministic synthetic parameters matching the PyTorch module's shapes."""
    ks = jax.random.split(key, 6)

    def conv_w(k, cin, cout):   # HWIO
        bound = 1.0 / jnp.sqrt(9.0 * cin)
        return jax.random.uniform(k, (3, 3, cin, cout), jnp.float32, -1.0, 1.0) * bound

    def conv_b(k, cin, cout):
        bound = 1.0 / jnp.sqrt(9.0 * cin)
        return jax.random.uniform(k, (1, cout), jnp.float32, -1.0, 1.0) * bound

    return dict(
        w_res=conv_w(ks[0], in_channel, output_channel),
        b_res=conv_b(ks[1], in_channel, output_channel),
        w1=conv_w(ks[2], in_channel, output_channel),
        b1=conv_b(ks[3], in_channel, output_channel),
        w2=conv_w(ks[4], output_channel, output_channel),
        b2=conv_b(ks[5], output_channel, output_channel),
        gamma=jnp.ones((1, output_channel), jnp.float32),   # BatchNorm2d default weight
        beta=jnp.zeros((1, output_channel), jnp.float32),   # BatchNorm2d default bias
    )


@jax.jit
def down_block_forward(x_nchw, params):
    x = jnp.transpose(x_nchw, (0, 2, 3, 1)).astype(jnp.float32)          # NCHW -> NHWC
    N, H, W, Cin = x.shape
    Cout = params["w_res"].shape[-1]
    assert H % 2 == 0 and W % 2 == 0, "MaxPool2d(2) here expects even H and W"
    Hp, Wp = H // 2, W // 2
    R = Hp * Wp
    M = N * R

    # MaxPool2d(2), 1-px zero padding and the first-layer im2col are trivially mem-bound
    # layout plumbing: done in the XLA wrapper.
    pooled = jnp.max(x.reshape(N, Hp, 2, Wp, 2, Cin), axis=(2, 4))
    xpad = jnp.pad(pooled, ((0, 0), (1, 1), (1, 1), (0, 0)))
    patches1 = jnp.concatenate(
        [xpad[:, dy:dy + Hp, dx:dx + Wp, :] for dy in range(3) for dx in range(3)],
        axis=-1).reshape(M, 9 * Cin).astype(jnp.bfloat16)                # (M, 9*Cin) bf16

    # Fused im2col weights: conv1 first (so h1 lands at lane offset 0), residual conv second.
    # HWIO (3,3,Cin,Cout) -> (9*Cin, Cout); bf16 for the MXU, biases / BN params stay f32.
    w_fused = jnp.concatenate([params["w1"], params["w_res"]], axis=-1)
    w_fused = w_fused.reshape(9 * Cin, 2 * Cout).astype(jnp.bfloat16)
    b_fused = jnp.concatenate([params["b1"], params["b_res"]], axis=-1)   # (1, 2*Cout) f32
    w2col = params["w2"].reshape(9 * Cout, Cout).astype(jnp.bfloat16)

    kernel = functools.partial(_down_block_kernel, N=N, Hp=Hp, Wp=Wp, Cout=Cout)

    flops = int(2 * M * (9 * Cin * 2 * Cout + 9 * Cout * Cout) + 8 * M * Cout)
    bytes_accessed = int(patches1.size * 2 + w_fused.size * 2 + w2col.size * 2
                         + (b_fused.size + 3 * Cout + M * Cout) * 4)

    out_flat = pl.pallas_call(
        kernel,
        grid=(1,),
        in_specs=[
            pl.BlockSpec((M, 9 * Cin), lambda i: (0, 0)),
            pl.BlockSpec((9 * Cin, 2 * Cout), lambda i: (0, 0)),
            pl.BlockSpec((1, 2 * Cout), lambda i: (0, 0)),
            pl.BlockSpec((9 * Cout, Cout), lambda i: (0, 0)),
            pl.BlockSpec((1, Cout), lambda i: (0, 0)),
            pl.BlockSpec((1, Cout), lambda i: (0, 0)),
            pl.BlockSpec((1, Cout), lambda i: (0, 0)),
        ],
        out_specs=pl.BlockSpec((M, Cout), lambda i: (0, 0)),
        out_shape=jax.ShapeDtypeStruct((M, Cout), jnp.float32),
        scratch_shapes=[
            pltpu.VMEM((N, Hp + 2, Wp + 2, Cout), jnp.float32),          # zero-padded conv1 out
        ],
        compiler_params=pltpu.CompilerParams(dimension_semantics=("arbitrary",)),
        cost_estimate=pl.CostEstimate(flops=flops, transcendentals=int(Cout),
                                      bytes_accessed=bytes_accessed),
    )(patches1, w_fused, b_fused, w2col, params["b2"], params["gamma"], params["beta"])

    out_nhwc = out_flat.reshape(N, Hp, Wp, Cout)
    return jnp.transpose(out_nhwc, (0, 3, 1, 2))                          # NHWC -> NCHW


def down_block_reference(x_nchw, params):
    """Pure-JAX reference (same math, XLA convs, f32) for validation."""
    x = jnp.transpose(x_nchw, (0, 2, 3, 1)).astype(jnp.float32)
    N, H, W, Cin = x.shape
    Hp, Wp = H // 2, W // 2
    pooled = jnp.max(x.reshape(N, Hp, 2, Wp, 2, Cin), axis=(2, 4))

    def conv(inp, w, b):
        y = lax.conv_general_dilated(inp, w, window_strides=(1, 1), padding="SAME",
                                     dimension_numbers=("NHWC", "HWIO", "NHWC"))
        return y + b.reshape(1, 1, 1, -1)

    res = conv(pooled, params["w_res"], params["b_res"])
    h = conv(pooled, params["w1"], params["b1"])
    h = conv(h, params["w2"], params["b2"])
    mean = jnp.mean(h, axis=(0, 1, 2), keepdims=True)
    var = jnp.mean(jnp.square(h - mean), axis=(0, 1, 2), keepdims=True)
    h = (h - mean) * lax.rsqrt(var + BN_EPS)
    h = h * params["gamma"].reshape(1, 1, 1, -1) + params["beta"].reshape(1, 1, 1, -1)
    out = res + jnp.maximum(h, 0.0)
    return jnp.transpose(out, (0, 3, 1, 2))


if __name__ == "__main__":
    key = jax.random.PRNGKey(0)
    k_x, k_p = jax.random.split(key)

    in_channel, output_channel = 4, 8
    x = jax.random.normal(k_x, (2, in_channel, 16, 16), jnp.float32)     # NCHW like PyTorch
    params = init_params(k_p, in_channel, output_channel)

    out = down_block_forward(x, params)
    out = jax.block_until_ready(out)
    assert out.shape == (2, output_channel, 8, 8), out.shape

    ref = down_block_reference(x, params)
    max_err = float(jnp.max(jnp.abs(out - ref)))
    # bf16 MXU operands vs. the f32 reference -> loosened tolerance (documented above).
    if not bool(jnp.allclose(out, ref, atol=5e-2, rtol=5e-2)):
        raise AssertionError(f"kernel mismatch vs reference, max abs err = {max_err}")

    print("KERNEL_OK")
</pallas_src>

<mosaic_0001>
module attributes {stable_mosaic.version = 11 : i64} {
  func.func @_down_block_kernel(%arg0: i32, %arg1: memref<128x36xbf16, #tpu.memory_space<vmem>>, %arg2: memref<36x16xbf16, #tpu.memory_space<vmem>>, %arg3: memref<1x16xf32, #tpu.memory_space<vmem>>, %arg4: memref<72x8xbf16, #tpu.memory_space<vmem>>, %arg5: memref<1x8xf32, #tpu.memory_space<vmem>>, %arg6: memref<1x8xf32, #tpu.memory_space<vmem>>, %arg7: memref<1x8xf32, #tpu.memory_space<vmem>>, %arg8: memref<128x8xf32, #tpu.memory_space<vmem>>, %arg9: memref<2x10x10x8xf32, #tpu.memory_space<vmem>>) attributes {dimension_semantics = [#tpu.dimension_semantics<arbitrary>], iteration_bounds = array<i64: 1>, scalar_prefetch = 0 : i64, scratch_operands = 1 : i64, tpu.core_type = #tpu.core_type<tc>, window_params = [{pipeline_mode = #tpu.pipeline_mode<synchronous>, transform_indices = @transform_0, window_bounds = array<i64: 128, 36>}, {pipeline_mode = #tpu.pipeline_mode<synchronous>, transform_indices = @transform_1, window_bounds = array<i64: 36, 16>}, {pipeline_mode = #tpu.pipeline_mode<synchronous>, transform_indices = @transform_2, window_bounds = array<i64: 1, 16>}, {pipeline_mode = #tpu.pipeline_mode<synchronous>, transform_indices = @transform_3, window_bounds = array<i64: 72, 8>}, {pipeline_mode = #tpu.pipeline_mode<synchronous>, transform_indices = @transform_4, window_bounds = array<i64: 1, 8>}, {pipeline_mode = #tpu.pipeline_mode<synchronous>, transform_indices = @transform_5, window_bounds = array<i64: 1, 8>}, {pipeline_mode = #tpu.pipeline_mode<synchronous>, transform_indices = @transform_6, window_bounds = array<i64: 1, 8>}, {pipeline_mode = #tpu.pipeline_mode<synchronous>, transform_indices = @transform_7, window_bounds = array<i64: 128, 8>}]} {
    %c0 = arith.constant 0 : index
    %c0_0 = arith.constant 0 : index
    %0 = vector.load %arg1[%c0, %c0_0] : memref<128x36xbf16, #tpu.memory_space<vmem>>, vector<128x36xbf16>
    %c0_1 = arith.constant 0 : index
    %c0_2 = arith.constant 0 : index
    %1 = vector.load %arg2[%c0_1, %c0_2] : memref<36x16xbf16, #tpu.memory_space<vmem>>, vector<36x16xbf16>
    %cst = arith.constant dense<0.000000e+00> : vector<128x16xf32>
    %2 = tpu.matmul %0, %1, %cst {dimension_numbers = #tpu.dot_dimension_numbers<[1], [0], [0], [1], [0, 0, 1, 1], [], []>} : vector<128x36xbf16>, vector<36x16xbf16>, vector<128x16xf32> -> vector<128x16xf32>
    %c0_3 = arith.constant 0 : index
    %c0_4 = arith.constant 0 : index
    %3 = vector.load %arg3[%c0_3, %c0_4] : memref<1x16xf32, #tpu.memory_space<vmem>>, vector<1x16xf32>
    %4 = vector.broadcast %3 : vector<1x16xf32> to vector<128x16xf32>
    %5 = arith.addf %2, %4 : vector<128x16xf32>
    %6 = vector.extract_strided_slice %5 {offsets = [0, 0], sizes = [128, 8], strides = [1, 1]} : vector<128x16xf32> to vector<128x8xf32>
    %7 = vector.extract_strided_slice %5 {offsets = [0, 8], sizes = [128, 8], strides = [1, 1]} : vector<128x16xf32> to vector<128x8xf32>
    %cst_5 = arith.constant 0.000000e+00 : f32
    %8 = vector.broadcast %cst_5 : f32 to vector<2x10x10x8xf32>
    %c0_6 = arith.constant 0 : index
    %c0_7 = arith.constant 0 : index
    %c0_8 = arith.constant 0 : index
    %c0_9 = arith.constant 0 : index
    %9 = vector.load %arg9[%c0_6, %c0_7, %c0_8, %c0_9] : memref<2x10x10x8xf32, #tpu.memory_space<vmem>>, vector<2x10x10x8xf32>
    tpu.vector_store %arg9[%c0_6, %c0_7, %c0_8, %c0_9], %8 {strides = array<i32>} : memref<2x10x10x8xf32, #tpu.memory_space<vmem>>, vector<2x10x10x8xf32>,
    %10 = vector.shape_cast %6 : vector<128x8xf32> to vector<2x8x8x8xf32>
    %c0_10 = arith.constant 0 : index
    %c1 = arith.constant 1 : index
    %c1_11 = arith.constant 1 : index
    %c0_12 = arith.constant 0 : index
    %11 = vector.load %arg9[%c0_10, %c1, %c1_11, %c0_12] : memref<2x10x10x8xf32, #tpu.memory_space<vmem>>, vector<2x8x8x8xf32>
    tpu.vector_store %arg9[%c0_10, %c1, %c1_11, %c0_12], %10 {strides = array<i32>} : memref<2x10x10x8xf32, #tpu.memory_space<vmem>>, vector<2x8x8x8xf32>,
    %c0_13 = arith.constant 0 : index
    %c0_14 = arith.constant 0 : index
    %c0_15 = arith.constant 0 : index
    %c0_16 = arith.constant 0 : index
    %12 = vector.load %arg9[%c0_13, %c0_14, %c0_15, %c0_16] : memref<2x10x10x8xf32, #tpu.memory_space<vmem>>, vector<2x8x8x8xf32>
    %13 = vector.shape_cast %12 : vector<2x8x8x8xf32> to vector<128x8xf32>
    %c0_17 = arith.constant 0 : index
    %c0_18 = arith.constant 0 : index
    %c1_19 = arith.constant 1 : index
    %c0_20 = arith.constant 0 : index
    %14 = vector.load %arg9[%c0_17, %c0_18, %c1_19, %c0_20] : memref<2x10x10x8xf32, #tpu.memory_space<vmem>>, vector<2x8x8x8xf32>
    %15 = vector.shape_cast %14 : vector<2x8x8x8xf32> to vector<128x8xf32>
    %c0_21 = arith.constant 0 : index
    %c0_22 = arith.constant 0 : index
    %c2 = arith.constant 2 : index
    %c0_23 = arith.constant 0 : index
    %16 = vector.load %arg9[%c0_21, %c0_22, %c2, %c0_23] : memref<2x10x10x8xf32, #tpu.memory_space<vmem>>, vector<2x8x8x8xf32>
    %17 = vector.shape_cast %16 : vector<2x8x8x8xf32> to vector<128x8xf32>
    %c0_24 = arith.constant 0 : index
    %c1_25 = arith.constant 1 : index
    %c0_26 = arith.constant 0 : index
    %c0_27 = arith.constant 0 : index
    %18 = vector.load %arg9[%c0_24, %c1_25, %c0_26, %c0_27] : memref<2x10x10x8xf32, #tpu.memory_space<vmem>>, vector<2x8x8x8xf32>
    %19 = vector.shape_cast %18 : vector<2x8x8x8xf32> to vector<128x8xf32>
    %c0_28 = arith.constant 0 : index
    %c1_29 = arith.constant 1 : index
    %c1_30 = arith.constant 1 : index
    %c0_31 = arith.constant 0 : index
    %20 = vector.load %arg9[%c0_28, %c1_29, %c1_30, %c0_31] : memref<2x10x10x8xf32, #tpu.memory_space<vmem>>, vector<2x8x8x8xf32>
    %21 = vector.shape_cast %20 : vector<2x8x8x8xf32> to vector<128x8xf32>
    %c0_32 = arith.constant 0 : index
    %c1_33 = arith.constant 1 : index
    %c2_34 = arith.constant 2 : index
    %c0_35 = arith.constant 0 : index
    %22 = vector.load %arg9[%c0_32, %c1_33, %c2_34, %c0_35] : memref<2x10x10x8xf32, #tpu.memory_space<vmem>>, vector<2x8x8x8xf32>
    %23 = vector.shape_cast %22 : vector<2x8x8x8xf32> to vector<128x8xf32>
    %c0_36 = arith.constant 0 : index
    %c2_37 = arith.constant 2 : index
    %c0_38 = arith.constant 0 : index
    %c0_39 = arith.constant 0 : index
    %24 = vector.load %arg9[%c0_36, %c2_37, %c0_38, %c0_39] : memref<2x10x10x8xf32, #tpu.memory_space<vmem>>, vector<2x8x8x8xf32>
    %25 = vector.shape_cast %24 : vector<2x8x8x8xf32> to vector<128x8xf32>
    %c0_40 = arith.constant 0 : index
    %c2_41 = arith.constant 2 : index
    %c1_42 = arith.constant 1 : index
    %c0_43 = arith.constant 0 : index
    %26 = vector.load %arg9[%c0_40, %c2_41, %c1_42, %c0_43] : memref<2x10x10x8xf32, #tpu.memory_space<vmem>>, vector<2x8x8x8xf32>
    %27 = vector.shape_cast %26 : vector<2x8x8x8xf32> to vector<128x8xf32>
    %c0_44 = arith.constant 0 : index
    %c2_45 = arith.constant 2 : index
    %c2_46 = arith.constant 2 : index
    %c0_47 = arith.constant 0 : index
    %28 = vector.load %arg9[%c0_44, %c2_45, %c2_46, %c0_47] : memref<2x10x10x8xf32, #tpu.memory_space<vmem>>, vector<2x8x8x8xf32>
    %29 = vector.shape_cast %28 : vector<2x8x8x8xf32> to vector<128x8xf32>
    %30 = tpu.concatenate %13, %15, %17, %19, %21, %23, %25, %27, %29 in 1 : vector<128x8xf32>, vector<128x8xf32>, vector<128x8xf32>, vector<128x8xf32>, vector<128x8xf32>, vector<128x8xf32>, vector<128x8xf32>, vector<128x8xf32>, vector<128x8xf32> -> vector<128x72xf32>
    %31 = arith.truncf %30 : vector<128x72xf32> to vector<128x72xbf16>
    %c0_48 = arith.constant 0 : index
    %c0_49 = arith.constant 0 : index
    %32 = vector.load %arg4[%c0_48, %c0_49] : memref<72x8xbf16, #tpu.memory_space<vmem>>, vector<72x8xbf16>
    %cst_50 = arith.constant dense<0.000000e+00> : vector<128x8xf32>
    %33 = tpu.matmul %31, %32, %cst_50 {dimension_numbers = #tpu.dot_dimension_numbers<[1], [0], [0], [1], [0, 0, 1, 1], [], []>} : vector<128x72xbf16>, vector<72x8xbf16>, vector<128x8xf32> -> vector<128x8xf32>
    %c0_51 = arith.constant 0 : index
    %c0_52 = arith.constant 0 : index
    %34 = vector.load %arg5[%c0_51, %c0_52] : memref<1x8xf32, #tpu.memory_space<vmem>>, vector<1x8xf32>
    %35 = vector.broadcast %34 : vector<1x8xf32> to vector<128x8xf32>
    %36 = arith.addf %33, %35 : vector<128x8xf32>
    %cst_53 = arith.constant dense<0.000000e+00> : vector<8xf32>
    %37 = vector.multi_reduction <add>, %36, %cst_53 [0] : vector<128x8xf32> to vector<8xf32>
    %38 = vector.shape_cast %37 : vector<8xf32> to vector<1x8xf32>
    %cst_54 = arith.constant 7.812500e-03 : f32
    %39 = vector.broadcast %cst_54 : f32 to vector<1x8xf32>
    %40 = arith.mulf %38, %39 : vector<1x8xf32>
    %41 = vector.broadcast %40 : vector<1x8xf32> to vector<128x8xf32>
    %42 = arith.subf %36, %41 : vector<128x8xf32>
    %43 = arith.mulf %42, %42 : vector<128x8xf32>
    %cst_55 = arith.constant dense<0.000000e+00> : vector<8xf32>
    %44 = vector.multi_reduction <add>, %43, %cst_55 [0] : vector<128x8xf32> to vector<8xf32>
    %45 = vector.shape_cast %44 : vector<8xf32> to vector<1x8xf32>
    %cst_56 = arith.constant 7.812500e-03 : f32
    %46 = vector.broadcast %cst_56 : f32 to vector<1x8xf32>
    %47 = arith.mulf %45, %46 : vector<1x8xf32>
    %c0_57 = arith.constant 0 : index
    %c0_58 = arith.constant 0 : index
    %48 = vector.load %arg6[%c0_57, %c0_58] : memref<1x8xf32, #tpu.memory_space<vmem>>, vector<1x8xf32>
    %cst_59 = arith.constant 9.99999974E-6 : f32
    %49 = vector.broadcast %cst_59 : f32 to vector<1x8xf32>
    %50 = arith.addf %47, %49 : vector<1x8xf32>
    %51 = math.rsqrt %50 : vector<1x8xf32>
    %52 = arith.mulf %48, %51 : vector<1x8xf32>
    %53 = vector.broadcast %52 : vector<1x8xf32> to vector<128x8xf32>
    %54 = arith.mulf %42, %53 : vector<128x8xf32>
    %c0_60 = arith.constant 0 : index
    %c0_61 = arith.constant 0 : index
    %55 = vector.load %arg7[%c0_60, %c0_61] : memref<1x8xf32, #tpu.memory_space<vmem>>, vector<1x8xf32>
    %56 = vector.broadcast %55 : vector<1x8xf32> to vector<128x8xf32>
    %57 = arith.addf %54, %56 : vector<128x8xf32>
    %cst_62 = arith.constant 0.000000e+00 : f32
    %58 = vector.broadcast %cst_62 : f32 to vector<128x8xf32>
    %59 = arith.maximumf %57, %58 : vector<128x8xf32>
    %60 = arith.addf %7, %59 : vector<128x8xf32>
    %c0_63 = arith.constant 0 : index
    %c0_64 = arith.constant 0 : index
    %61 = vector.load %arg8[%c0_63, %c0_64] : memref<128x8xf32, #tpu.memory_space<vmem>>, vector<128x8xf32>
    tpu.vector_store %arg8[%c0_63, %c0_64], %60 {strides = array<i32>} : memref<128x8xf32, #tpu.memory_space<vmem>>, vector<128x8xf32>,
    return
  }
  func.func @transform_0(%arg0: i32) -> (i32, i32) {
    %c0_i32 = arith.constant 0 : i32
    %c0_i32_0 = arith.constant 0 : i32
    %c0_i32_1 = arith.constant 0 : i32
    return %c0_i32, %c0_i32_0 : i32, i32
  }
  func.func @transform_1(%arg0: i32) -> (i32, i32) {
    %c0_i32 = arith.constant 0 : i32
    %c0_i32_0 = arith.constant 0 : i32
    %c0_i32_1 = arith.constant 0 : i32
    return %c0_i32, %c0_i32_0 : i32, i32
  }
  func.func @transform_2(%arg0: i32) -> (i32, i32) {
    %c0_i32 = arith.constant 0 : i32
    %c0_i32_0 = arith.constant 0 : i32
    %c0_i32_1 = arith.constant 0 : i32
    return %c0_i32, %c0_i32_0 : i32, i32
  }
  func.func @transform_3(%arg0: i32) -> (i32, i32) {
    %c0_i32 = arith.constant 0 : i32
    %c0_i32_0 = arith.constant 0 : i32
    %c0_i32_1 = arith.constant 0 : i32
    return %c0_i32, %c0_i32_0 : i32, i32
  }
  func.func @transform_4(%arg0: i32) -> (i32, i32) {
    %c0_i32 = arith.constant 0 : i32
    %c0_i32_0 = arith.constant 0 : i32
    %c0_i32_1 = arith.constant 0 : i32
    return %c0_i32, %c0_i32_0 : i32, i32
  }
  func.func @transform_5(%arg0: i32) -> (i32, i32) {
    %c0_i32 = arith.constant 0 : i32
    %c0_i32_0 = arith.constant 0 : i32
    %c0_i32_1 = arith.constant 0 : i32
    return %c0_i32, %c0_i32_0 : i32, i32
  }
  func.func @transform_6(%arg0: i32) -> (i32, i32) {
    %c0_i32 = arith.constant 0 : i32
    %c0_i32_0 = arith.constant 0 : i32
    %c0_i32_1 = arith.constant 0 : i32
    return %c0_i32, %c0_i32_0 : i32, i32
  }
  func.func @transform_7(%arg0: i32) -> (i32, i32) {
    %c0_i32 = arith.constant 0 : i32
    %c0_i32_0 = arith.constant 0 : i32
    %c0_i32_1 = arith.constant 0 : i32
    return %c0_i32, %c0_i32_0 : i32, i32
  }
}

</mosaic_0001>

<llo_original>
// kernel: down_block_forward.1
$region0: #{down_block_forward.1}
  #allocation0 [shape = 'u32[]', space=smem, size = 0x4, offset = 0x4, fixed_abs, tag = 'smem constant byte address 0x4 - core index']
  #allocation1 [shape = 'u32[144,128]{1,0:T(1,128)}', space=vmem, size = 0x12000, scoped, tag = 'internal scratch']
  #allocation2 [shape = 'f32[2,10,10,8]{3,2,1,0:T(8,128)}', space=vmem, size = 0x28000, scoped, tag = 'scratch operand']
  %s0 = inlined_call_operand.vmem [shape: bf16[128,36], index: 0, kind: input, shape index: {}]
  %s1 = inlined_call_operand.vmem [shape: bf16[36,16], index: 1, kind: input, shape index: {}]
  %s2 = inlined_call_operand.vmem [shape: f32[1,16], index: 2, kind: input, shape index: {}]
  %s3 = inlined_call_operand.vmem [shape: bf16[72,8], index: 3, kind: input, shape index: {}]
  %s4 = inlined_call_operand.vmem [shape: f32[1,8], index: 4, kind: input, shape index: {}]
  %s5 = inlined_call_operand.vmem [shape: f32[1,8], index: 5, kind: input, shape index: {}]
  %s6 = inlined_call_operand.vmem [shape: f32[1,8], index: 6, kind: input, shape index: {}]
  %s7 = inlined_call_operand.vmem [shape: f32[128,8], index: 7, kind: output, shape index: {}]
  %s8 = sld [smem:[#allocation0]]
  $region38: #{down_block_forward.1} parent=0
    _
  %s10 = ssub.s32 1, %s8
  %s11 = scalar_select 0, %s10, %s8
  // Predicated region
  $region2: #{down_block_forward.1} parent=0 // pred_check
    _
  $region3: #{down_block_forward.1} parent=0 // pred_check_branch
    %13 = sbr.rel (0) target = $region5
  $region4: #{down_block_forward.1} parent=0 // pred_region
    _
  $region5: #{down_block_forward.1} parent=0 // pred_fallthru
    _
  // Predicated region
  $region6: #{down_block_forward.1} parent=0 // pred_check
    _
  $region7: #{down_block_forward.1} parent=0 // pred_check_branch
    %15 = sbr.rel (0) target = $region9
  $region8: #{down_block_forward.1} parent=0 // pred_region
    _
  $region9: #{down_block_forward.1} parent=0 // pred_fallthru
    _
  // Predicated region
  $region10: #{down_block_forward.1} parent=0 // pred_check
    _
  $region11: #{down_block_forward.1} parent=0 // pred_check_branch
    %17 = sbr.rel (0) target = $region13
  $region12: #{down_block_forward.1} parent=0 // pred_region
    _
  $region13: #{down_block_forward.1} parent=0 // pred_fallthru
    _
  // Predicated region
  $region14: #{down_block_forward.1} parent=0 // pred_check
    _
  $region15: #{down_block_forward.1} parent=0 // pred_check_branch
    %19 = sbr.rel (0) target = $region17
  $region16: #{down_block_forward.1} parent=0 // pred_region
    _
  $region17: #{down_block_forward.1} parent=0 // pred_fallthru
    _
  // Predicated region
  $region18: #{down_block_forward.1} parent=0 // pred_check
    _
  $region19: #{down_block_forward.1} parent=0 // pred_check_branch
    %21 = sbr.rel (0) target = $region21
  $region20: #{down_block_forward.1} parent=0 // pred_region
    _
  $region21: #{down_block_forward.1} parent=0 // pred_fallthru
    _
  // Predicated region
  $region22: #{down_block_forward.1} parent=0 // pred_check
    _
  $region23: #{down_block_forward.1} parent=0 // pred_check_branch
    %23 = sbr.rel (0) target = $region25
  $region24: #{down_block_forward.1} parent=0 // pred_region
    _
  $region25: #{down_block_forward.1} parent=0 // pred_fallthru
    _
  // Predicated region
  $region26: #{down_block_forward.1} parent=0 // pred_check
    _
  $region27: #{down_block_forward.1} parent=0 // pred_check_branch
    %25 = sbr.rel (0) target = $region29
  $region28: #{down_block_forward.1} parent=0 // pred_region
    _
  $region29: #{down_block_forward.1} parent=0 // pred_fallthru
    _
  %v27 = vld [vmem:[%s0] sm:$0xf]
  %v28 = vld [vmem:[%s0 + $0x4] sm:$0xf]
  %v29 = vld [vmem:[%s0 + $0x8] sm:$0xf]
  %v30 = vld [vmem:[%s0 + $0xc] sm:$0xf]
  %v31 = vld [vmem:[%s0 + $0x10] sm:$0xf]
  %v32 = vld [vmem:[%s0 + $0x14] sm:$0xf]
  %v33 = vld [vmem:[%s0 + $0x18] sm:$0xf]
  %v34 = vld [vmem:[%s0 + $0x1c] sm:$0xf]
  %v35 = vld [vmem:[%s0 + $0x20] sm:$0xf]
  %v36 = vld [vmem:[%s0 + $0x24] sm:$0xf]
  %v37 = vld [vmem:[%s0 + $0x28] sm:$0xf]
  %v38 = vld [vmem:[%s0 + $0x2c] sm:$0xf]
  %v39 = vld [vmem:[%s0 + $0x30] sm:$0xf]
  %v40 = vld [vmem:[%s0 + $0x34] sm:$0xf]
  %v41 = vld [vmem:[%s0 + $0x38] sm:$0xf]
  %v42 = vld [vmem:[%s0 + $0x3c] sm:$0xf]
  %v43 = vld [vmem:[%s1] sm:$0xf]
  %v44 = vld [vmem:[%s1 + $0x4] sm:$0xf]
  %v45 = vld [vmem:[%s1 + $0x8] sm:$0xf]
  %v46 = vld [vmem:[%s1 + $0xc] sm:$0xf]
  %v47 = vld [vmem:[%s1 + $0x10] sm:$0x3]
  %v48 = vld [vmem:[%s2] sm:$0x1]
  %v50 = vlaneseq
  %v51 = vshrl.u32 %v50, 7
  %v52 = vsub.s32 0, %v51
  %v53 = vrot.slane %v48, %v52
  %v71 = vunpack.c.l.b16 %v27
  %v72 = vunpack.c.l.b16 %v28
  %v73 = vunpack.c.l.b16 %v29
  %v74 = vunpack.c.l.b16 %v30
  %v75 = vunpack.c.l.b16 %v31
  %v76 = vunpack.c.l.b16 %v32
  %v77 = vunpack.c.l.b16 %v33
  %v78 = vunpack.c.l.b16 %v34
  %v79 = vunpack.c.l.b16 %v35
  %v80 = vunpack.c.l.b16 %v36
  %v81 = vunpack.c.l.b16 %v37
  %v82 = vunpack.c.l.b16 %v38
  %v83 = vunpack.c.l.b16 %v39
  %v84 = vunpack.c.l.b16 %v40
  %v85 = vunpack.c.l.b16 %v41
  %v86 = vunpack.c.l.b16 %v42
  %v87 = vpack.c.b16 %v72, %v71
  %v88 = vpack.c.b16 %v74, %v73
  %v89 = vpack.c.b16 %v76, %v75
  %v90 = vpack.c.b16 %v78, %v77
  %v91 = vpack.c.b16 %v80, %v79
  %v92 = vpack.c.b16 %v82, %v81
  %v93 = vpack.c.b16 %v84, %v83
  %v94 = vpack.c.b16 %v86, %v85
  %v100 = vunpack.c.l.b16 %v43
  %v101 = vunpack.c.l.b16 %v44
  %v102 = vunpack.c.l.b16 %v45
  %v103 = vunpack.c.l.b16 %v46
  %v104 = vunpack.c.l.b16 %v47
  %v105 = vpack.c.b16 %v101, %v100
  %v106 = vpack.c.b16 %v103, %v102
  %v107 = vpack.c.b16 %v104, %v104
  %vm110 = vcmask 293888
  %v112 = vsel %vm110, %v87, 0
  %v115 = vsel %vm110, %v88, 0
  %v118 = vsel %vm110, %v89, 0
  %v121 = vsel %vm110, %v90, 0
  %v124 = vsel %vm110, %v91, 0
  %v127 = vsel %vm110, %v92, 0
  %v130 = vsel %vm110, %v93, 0
  %v133 = vsel %vm110, %v94, 0
  %vm135 = vcmask 1041408
  %v137 = vsel %vm135, %v107, 0
  %139 = vmatprep.subr.bf16.mxu0 0
  %140 = vmatpush1.bf16.msra.mxu0 0
  %141 = vmatprep.subr.bf16.mxu0 0
  %142 = vmatpush1.bf16.msra.mxu0 0
  %143 = vmatprep.subr.bf16.mxu0 0
  %144 = vmatpush1.bf16.msra.mxu0 0
  %145 = vmatprep.subr.bf16.mxu0 0
  %146 = vmatpush1.bf16.msra.mxu0 0
  %147 = vmatprep.subr.bf16.mxu0 0
  %148 = vmatpush1.bf16.msra.mxu0 0
  %149 = vmatprep.subr.bf16.mxu0 0
  %150 = vmatpush1.bf16.msra.mxu0 %v137
  %151 = vmatprep.subr.bf16.mxu0 0
  %152 = vmatpush1.bf16.msra.mxu0 %v106
  %153 = vmatprep.subr.bf16.mxu0 0
  %154 = vmatpush1.bf16.msra.mxu0 %v105
  %155 = vmatprep.subr.bf16.mxu0 0
  %156 = vmatpush2.bf16.msra.mxu0 0
  %157 = vmatprep.subr.bf16.mxu0 0
  %158 = vmatpush2.bf16.msra.mxu0 0
  %159 = vmatprep.subr.bf16.mxu0 0
  %160 = vmatpush2.bf16.msra.mxu0 0
  %161 = vmatprep.subr.bf16.mxu0 0
  %162 = vmatpush2.bf16.msra.mxu0 0
  %163 = vmatprep.subr.bf16.mxu0 0
  %164 = vmatpush2.bf16.msra.mxu0 0
  %165 = vmatprep.subr.bf16.mxu0 0
  %166 = vmatpush2.bf16.msra.mxu0 0
  %167 = vmatprep.subr.bf16.mxu0 0
  %168 = vmatpush2.bf16.msra.mxu0 0
  %169 = vmatprep.subr.bf16.mxu0 0
  %170 = vmatpush2.bf16.msra.mxu0 0
  %171 = vmatprep.mubr.bf16.mxu0 0
  %172 = vmatmul.mubr.bf16.gmra.mxu0 %v112
  %v173 = vpop.f32.mrf.mxu0
  %v174 = vadd.f32 %v53, %v173
  %v175 = vpop.f32.mrf.mxu0
  %v176 = vpop.f32.mrf.mxu0
  %v177 = vadd.f32 %v53, %v176
  %v178 = vpop.f32.mrf.mxu0
  %179 = vmatprep.mubr.bf16.mxu0 0
  %180 = vmatmul.mubr.bf16.gmra.mxu0 %v115
  %v181 = vpop.f32.mrf.mxu0
  %v182 = vadd.f32 %v53, %v181
  %v183 = vpop.f32.mrf.mxu0
  %v184 = vpop.f32.mrf.mxu0
  %v185 = vadd.f32 %v53, %v184
  %v186 = vpop.f32.mrf.mxu0
  %187 = vmatprep.mubr.bf16.mxu0 0
  %188 = vmatmul.mubr.bf16.gmra.mxu0 %v118
  %v189 = vpop.f32.mrf.mxu0
  %v190 = vadd.f32 %v53, %v189
  %v191 = vpop.f32.mrf.mxu0
  %v192 = vpop.f32.mrf.mxu0
  %v193 = vadd.f32 %v53, %v192
  %v194 = vpop.f32.mrf.mxu0
  %195 = vmatprep.mubr.bf16.mxu0 0
  %196 = vmatmul.mubr.bf16.gmra.mxu0 %v121
  %v197 = vpop.f32.mrf.mxu0
  %v198 = vadd.f32 %v53, %v197
  %v199 = vpop.f32.mrf.mxu0
  %v200 = vpop.f32.mrf.mxu0
  %v201 = vadd.f32 %v53, %v200
  %v202 = vpop.f32.mrf.mxu0
  %203 = vmatprep.mubr.bf16.mxu0 0
  %204 = vmatmul.mubr.bf16.gmra.mxu0 %v124
  %v205 = vpop.f32.mrf.mxu0
  %v206 = vadd.f32 %v53, %v205
  %v207 = vpop.f32.mrf.mxu0
  %v208 = vpop.f32.mrf.mxu0
  %v209 = vadd.f32 %v53, %v208
  %v210 = vpop.f32.mrf.mxu0
  %211 = vmatprep.mubr.bf16.mxu0 0
  %212 = vmatmul.mubr.bf16.gmra.mxu0 %v127
  %v213 = vpop.f32.mrf.mxu0
  %v214 = vadd.f32 %v53, %v213
  %v215 = vpop.f32.mrf.mxu0
  %v216 = vpop.f32.mrf.mxu0
  %v217 = vadd.f32 %v53, %v216
  %v218 = vpop.f32.mrf.mxu0
  %219 = vmatprep.mubr.bf16.mxu0 0
  %220 = vmatmul.mubr.bf16.gmra.mxu0 %v130
  %v221 = vpop.f32.mrf.mxu0
  %v222 = vadd.f32 %v53, %v221
  %v223 = vpop.f32.mrf.mxu0
  %v224 = vpop.f32.mrf.mxu0
  %v225 = vadd.f32 %v53, %v224
  %v226 = vpop.f32.mrf.mxu0
  %227 = vmatprep.mubr.bf16.mxu0 0
  %228 = vmatmul.mubr.bf16.gmra.mxu0 %v133
  %v229 = vpop.f32.mrf.mxu0
  %v230 = vadd.f32 %v53, %v229
  %v231 = vpop.f32.mrf.mxu0
  %v232 = vpop.f32.mrf.mxu0
  %v233 = vadd.f32 %v53, %v232
  %v234 = vpop.f32.mrf.mxu0
  %235 = vdwg.mxu0
  %vm236 = vcmask 64512
  %237 = vst.msk [vmem:[#allocation2] sm:$0xff] %vm236, 0.0
  %vm238 = vcmask 58368
  %239 = vst.msk [vmem:[#allocation2 + $0x8] sm:$0x3] %vm238, 0.0
  %240 = vst.msk [vmem:[#allocation2 + $0x10] sm:$0xff] %vm236, 0.0
  %241 = vst.msk [vmem:[#allocation2 + $0x18] sm:$0x3] %vm238, 0.0
  %242 = vst.msk [vmem:[#allocation2 + $0x20] sm:$0xff] %vm236, 0.0
  %243 = vst.msk [vmem:[#allocation2 + $0x28] sm:$0x3] %vm238, 0.0
  %244 = vst.msk [vmem:[#allocation2 + $0x30] sm:$0xff] %vm236, 0.0
  %245 = vst.msk [vmem:[#allocation2 + $0x38] sm:$0x3] %vm238, 0.0
  %246 = vst.msk [vmem:[#allocation2 + $0x40] sm:$0xff] %vm236, 0.0
  %247 = vst.msk [vmem:[#allocation2 + $0x48] sm:$0x3] %vm238, 0.0
  %248 = vst.msk [vmem:[#allocation2 + $0x50] sm:$0xff] %vm236, 0.0
  %249 = vst.msk [vmem:[#allocation2 + $0x58] sm:$0x3] %vm238, 0.0
  %250 = vst.msk [vmem:[#allocation2 + $0x60] sm:$0xff] %vm236, 0.0
  %251 = vst.msk [vmem:[#allocation2 + $0x68] sm:$0x3] %vm238, 0.0
  %252 = vst.msk [vmem:[#allocation2 + $0x70] sm:$0xff] %vm236, 0.0
  %253 = vst.msk [vmem:[#allocation2 + $0x78] sm:$0x3] %vm238, 0.0
  %254 = vst.msk [vmem:[#allocation2 + $0x80] sm:$0xff] %vm236, 0.0
  %255 = vst.msk [vmem:[#allocation2 + $0x88] sm:$0x3] %vm238, 0.0
  %256 = vst.msk [vmem:[#allocation2 + $0x90] sm:$0xff] %vm236, 0.0
  %257 = vst.msk [vmem:[#allocation2 + $0x98] sm:$0x3] %vm238, 0.0
  %258 = vst.msk [vmem:[#allocation2 + $0xa0] sm:$0xff] %vm236, 0.0
  %259 = vst.msk [vmem:[#allocation2 + $0xa8] sm:$0x3] %vm238, 0.0
  %260 = vst.msk [vmem:[#allocation2 + $0xb0] sm:$0xff] %vm236, 0.0
  %261 = vst.msk [vmem:[#allocation2 + $0xb8] sm:$0x3] %vm238, 0.0
  %262 = vst.msk [vmem:[#allocation2 + $0xc0] sm:$0xff] %vm236, 0.0
  %263 = vst.msk [vmem:[#allocation2 + $0xc8] sm:$0x3] %vm238, 0.0
  %264 = vst.msk [vmem:[#allocation2 + $0xd0] sm:$0xff] %vm236, 0.0
  %265 = vst.msk [vmem:[#allocation2 + $0xd8] sm:$0x3] %vm238, 0.0
  %266 = vst.msk [vmem:[#allocation2 + $0xe0] sm:$0xff] %vm236, 0.0
  %267 = vst.msk [vmem:[#allocation2 + $0xe8] sm:$0x3] %vm238, 0.0
  %268 = vst.msk [vmem:[#allocation2 + $0xf0] sm:$0xff] %vm236, 0.0
  %269 = vst.msk [vmem:[#allocation2 + $0xf8] sm:$0x3] %vm238, 0.0
  %270 = vst.msk [vmem:[#allocation2 + $0x100] sm:$0xff] %vm236, 0.0
  %271 = vst.msk [vmem:[#allocation2 + $0x108] sm:$0x3] %vm238, 0.0
  %272 = vst.msk [vmem:[#allocation2 + $0x110] sm:$0xff] %vm236, 0.0
  %273 = vst.msk [vmem:[#allocation2 + $0x118] sm:$0x3] %vm238, 0.0
  %274 = vst.msk [vmem:[#allocation2 + $0x120] sm:$0xff] %vm236, 0.0
  %275 = vst.msk [vmem:[#allocation2 + $0x128] sm:$0x3] %vm238, 0.0
  %276 = vst.msk [vmem:[#allocation2 + $0x130] sm:$0xff] %vm236, 0.0
  %277 = vst.msk [vmem:[#allocation2 + $0x138] sm:$0x3] %vm238, 0.0
  %s278 = scalar_lea.vmem [#allocation2], 16
  %279 = vst.msk [vmem:[%s278 + $0x1] sm:$0xff] %vm236, %v174
  %280 = vst.msk [vmem:[%s278 + $0x11] sm:$0xff] %vm236, %v177
  %281 = vst.msk [vmem:[%s278 + $0x21] sm:$0xff] %vm236, %v182
  %282 = vst.msk [vmem:[%s278 + $0x31] sm:$0xff] %vm236, %v185
  %283 = vst.msk [vmem:[%s278 + $0x41] sm:$0xff] %vm236, %v190
  %284 = vst.msk [vmem:[%s278 + $0x51] sm:$0xff] %vm236, %v193
  %285 = vst.msk [vmem:[%s278 + $0x61] sm:$0xff] %vm236, %v198
  %286 = vst.msk [vmem:[%s278 + $0x71] sm:$0xff] %vm236, %v201
  %287 = vst.msk [vmem:[%s278 + $0xa1] sm:$0xff] %vm236, %v206
  %288 = vst.msk [vmem:[%s278 + $0xb1] sm:$0xff] %vm236, %v209
  %289 = vst.msk [vmem:[%s278 + $0xc1] sm:$0xff] %vm236, %v214
  %290 = vst.msk [vmem:[%s278 + $0xd1] sm:$0xff] %vm236, %v217
  %291 = vst.msk [vmem:[%s278 + $0xe1] sm:$0xff] %vm236, %v222
  %292 = vst.msk [vmem:[%s278 + $0xf1] sm:$0xff] %vm236, %v225
  %293 = vst.msk [vmem:[%s278 + $0x101] sm:$0xff] %vm236, %v230
  %294 = vst.msk [vmem:[%s278 + $0x111] sm:$0xff] %vm236, %v233
  %v295 = vld [vmem:[#allocation2] sm:$0xff]
  %v296 = vld [vmem:[#allocation2 + $0x10] sm:$0xff]
  %v297 = vld [vmem:[#allocation2 + $0x20] sm:$0xff]
  %v298 = vld [vmem:[#allocation2 + $0x30] sm:$0xff]
  %v299 = vld [vmem:[#allocation2 + $0x40] sm:$0xff]
  %v300 = vld [vmem:[#allocation2 + $0x50] sm:$0xff]
  %v301 = vld [vmem:[#allocation2 + $0x60] sm:$0xff]
  %v302 = vld [vmem:[#allocation2 + $0x70] sm:$0xff]
  %v303 = vld [vmem:[#allocation2 + $0xa0] sm:$0xff]
  %v304 = vld [vmem:[#allocation2 + $0xb0] sm:$0xff]
  %v305 = vld [vmem:[#allocation2 + $0xc0] sm:$0xff]
  %v306 = vld [vmem:[#allocation2 + $0xd0] sm:$0xff]
  %v307 = vld [vmem:[#allocation2 + $0xe0] sm:$0xff]
  %v308 = vld [vmem:[#allocation2 + $0xf0] sm:$0xff]
  %v309 = vld [vmem:[#allocation2 + $0x100] sm:$0xff]
  %v310 = vld [vmem:[#allocation2 + $0x110] sm:$0xff]
  %v311 = vld [vmem:[#allocation2 + $0x1] sm:$0xff]
  %v312 = vld [vmem:[#allocation2 + $0x11] sm:$0xff]
  %v313 = vld [vmem:[#allocation2 + $0x21] sm:$0xff]
  %v314 = vld [vmem:[#allocation2 + $0x31] sm:$0xff]
  %v315 = vld [vmem:[#allocation2 + $0x41] sm:$0xff]
  %v316 = vld [vmem:[#allocation2 + $0x51] sm:$0xff]
  %v317 = vld [vmem:[#allocation2 + $0x61] sm:$0xff]
  %v318 = vld [vmem:[#allocation2 + $0x71] sm:$0xff]
  %v319 = vld [vmem:[#allocation2 + $0xa1] sm:$0xff]
  %v320 = vld [vmem:[#allocation2 + $0xb1] sm:$0xff]
  %v321 = vld [vmem:[#allocation2 + $0xc1] sm:$0xff]
  %v322 = vld [vmem:[#allocation2 + $0xd1] sm:$0xff]
  %v323 = vld [vmem:[#allocation2 + $0xe1] sm:$0xff]
  %v324 = vld [vmem:[#allocation2 + $0xf1] sm:$0xff]
  %v325 = vld [vmem:[#allocation2 + $0x101] sm:$0xff]
  %v326 = vld [vmem:[#allocation2 + $0x111] sm:$0xff]
  %v327 = vld [vmem:[#allocation2 + $0x2] sm:$0xff]
  %v328 = vld [vmem:[#allocation2 + $0x12] sm:$0xff]
  %v329 = vld [vmem:[#allocation2 + $0x22] sm:$0xff]
  %v330 = vld [vmem:[#allocation2 + $0x32] sm:$0xff]
  %v331 = vld [vmem:[#allocation2 + $0x42] sm:$0xff]
  %v332 = vld [vmem:[#allocation2 + $0x52] sm:$0xff]
  %v333 = vld [vmem:[#allocation2 + $0x62] sm:$0xff]
  %v334 = vld [vmem:[#allocation2 + $0x72] sm:$0xff]
  %v335 = vld [vmem:[#allocation2 + $0xa2] sm:$0xff]
  %v336 = vld [vmem:[#allocation2 + $0xb2] sm:$0xff]
  %v337 = vld [vmem:[#allocation2 + $0xc2] sm:$0xff]
  %v338 = vld [vmem:[#allocation2 + $0xd2] sm:$0xff]
  %v339 = vld [vmem:[#allocation2 + $0xe2] sm:$0xff]
  %v340 = vld [vmem:[#allocation2 + $0xf2] sm:$0xff]
  %v341 = vld [vmem:[#allocation2 + $0x102] sm:$0xff]
  %v342 = vld [vmem:[#allocation2 + $0x112] sm:$0xff]
  %v343 = vld [vmem:[%s278] sm:$0xff]
  %v344 = vld [vmem:[%s278 + $0x10] sm:$0xff]
  %v345 = vld [vmem:[%s278 + $0x20] sm:$0xff]
  %v346 = vld [vmem:[%s278 + $0x30] sm:$0xff]
  %v347 = vld [vmem:[%s278 + $0x40] sm:$0xff]
  %v348 = vld [vmem:[%s278 + $0x50] sm:$0xff]
  %v349 = vld [vmem:[%s278 + $0x60] sm:$0xff]
  %v350 = vld [vmem:[%s278 + $0x70] sm:$0xff]
  %v351 = vld [vmem:[%s278 + $0xa0] sm:$0xff]
  %v352 = vld [vmem:[%s278 + $0xb0] sm:$0xff]
  %v353 = vld [vmem:[%s278 + $0xc0] sm:$0xff]
  %v354 = vld [vmem:[%s278 + $0xd0] sm:$0xff]
  %v355 = vld [vmem:[%s278 + $0xe0] sm:$0xff]
  %v356 = vld [vmem:[%s278 + $0xf0] sm:$0xff]
  %v357 = vld [vmem:[%s278 + $0x100] sm:$0xff]
  %v358 = vld [vmem:[%s278 + $0x110] sm:$0xff]
  %v359 = vld [vmem:[%s278 + $0x1] sm:$0xff]
  %v360 = vld [vmem:[%s278 + $0x11] sm:$0xff]
  %v361 = vld [vmem:[%s278 + $0x21] sm:$0xff]
  %v362 = vld [vmem:[%s278 + $0x31] sm:$0xff]
  %v363 = vld [vmem:[%s278 + $0x41] sm:$0xff]
  %v364 = vld [vmem:[%s278 + $0x51] sm:$0xff]
  %v365 = vld [vmem:[%s278 + $0x61] sm:$0xff]
  %v366 = vld [vmem:[%s278 + $0x71] sm:$0xff]
  %v367 = vld [vmem:[%s278 + $0xa1] sm:$0xff]
  %v368 = vld [vmem:[%s278 + $0xb1] sm:$0xff]
  %v369 = vld [vmem:[%s278 + $0xc1] sm:$0xff]
  %v370 = vld [vmem:[%s278 + $0xd1] sm:$0xff]
  %v371 = vld [vmem:[%s278 + $0xe1] sm:$0xff]
  %v372 = vld [vmem:[%s278 + $0xf1] sm:$0xff]
  %v373 = vld [vmem:[%s278 + $0x101] sm:$0xff]
  %v374 = vld [vmem:[%s278 + $0x111] sm:$0xff]
  %v375 = vld [vmem:[%s278 + $0x2] sm:$0xff]
  %v376 = vld [vmem:[%s278 + $0x12] sm:$0xff]
  %v377 = vld [vmem:[%s278 + $0x22] sm:$0xff]
  %v378 = vld [vmem:[%s278 + $0x32] sm:$0xff]
  %v379 = vld [vmem:[%s278 + $0x42] sm:$0xff]
  %v380 = vld [vmem:[%s278 + $0x52] sm:$0xff]
  %v381 = vld [vmem:[%s278 + $0x62] sm:$0xff]
  %v382 = vld [vmem:[%s278 + $0x72] sm:$0xff]
  %v383 = vld [vmem:[%s278 + $0xa2] sm:$0xff]
  %v384 = vld [vmem:[%s278 + $0xb2] sm:$0xff]
  %v385 = vld [vmem:[%s278 + $0xc2] sm:$0xff]
  %v386 = vld [vmem:[%s278 + $0xd2] sm:$0xff]
  %v387 = vld [vmem:[%s278 + $0xe2] sm:$0xff]
  %v388 = vld [vmem:[%s278 + $0xf2] sm:$0xff]
  %v389 = vld [vmem:[%s278 + $0x102] sm:$0xff]
  %v390 = vld [vmem:[%s278 + $0x112] sm:$0xff]
  %s391 = scalar_lea.vmem [#allocation2], 32
  %v392 = vld [vmem:[%s391] sm:$0xff]
  %v393 = vld [vmem:[%s391 + $0x10] sm:$0xff]
  %v394 = vld [vmem:[%s391 + $0x20] sm:$0xff]
  %v395 = vld [vmem:[%s391 + $0x30] sm:$0xff]
  %v396 = vld [vmem:[%s391 + $0x40] sm:$0xff]
  %v397 = vld [vmem:[%s391 + $0x50] sm:$0xff]
  %v398 = vld [vmem:[%s391 + $0x60] sm:$0xff]
  %v399 = vld [vmem:[%s391 + $0x70] sm:$0xff]
  %v400 = vld [vmem:[%s391 + $0xa0] sm:$0xff]
  %v401 = vld [vmem:[%s391 + $0xb0] sm:$0xff]
  %v402 = vld [vmem:[%s391 + $0xc0] sm:$0xff]
  %v403 = vld [vmem:[%s391 + $0xd0] sm:$0xff]
  %v404 = vld [vmem:[%s391 + $0xe0] sm:$0xff]
  %v405 = vld [vmem:[%s391 + $0xf0] sm:$0xff]
  %v406 = vld [vmem:[%s391 + $0x100] sm:$0xff]
  %v407 = vld [vmem:[%s391 + $0x110] sm:$0xff]
  %v408 = vld [vmem:[%s391 + $0x1] sm:$0xff]
  %v409 = vld [vmem:[%s391 + $0x11] sm:$0xff]
  %v410 = vld [vmem:[%s391 + $0x21] sm:$0xff]
  %v411 = vld [vmem:[%s391 + $0x31] sm:$0xff]
  %v412 = vld [vmem:[%s391 + $0x41] sm:$0xff]
  %v413 = vld [vmem:[%s391 + $0x51] sm:$0xff]
  %v414 = vld [vmem:[%s391 + $0x61] sm:$0xff]
  %v415 = vld [vmem:[%s391 + $0x71] sm:$0xff]
  %v416 = vld [vmem:[%s391 + $0xa1] sm:$0xff]
  %v417 = vld [vmem:[%s391 + $0xb1] sm:$0xff]
  %v418 = vld [vmem:[%s391 + $0xc1] sm:$0xff]
  %v419 = vld [vmem:[%s391 + $0xd1] sm:$0xff]
  %v420 = vld [vmem:[%s391 + $0xe1] sm:$0xff]
  %v421 = vld [vmem:[%s391 + $0xf1] sm:$0xff]
  %v422 = vld [vmem:[%s391 + $0x101] sm:$0xff]
  %v423 = vld [vmem:[%s391 + $0x111] sm:$0xff]
  %v424 = vld [vmem:[%s391 + $0x2] sm:$0xff]
  %v425 = vld [vmem:[%s391 + $0x12] sm:$0xff]
  %v426 = vld [vmem:[%s391 + $0x22] sm:$0xff]
  %v427 = vld [vmem:[%s391 + $0x32] sm:$0xff]
  %v428 = vld [vmem:[%s391 + $0x42] sm:$0xff]
  %v429 = vld [vmem:[%s391 + $0x52] sm:$0xff]
  %v430 = vld [vmem:[%s391 + $0x62] sm:$0xff]
  %v431 = vld [vmem:[%s391 + $0x72] sm:$0xff]
  %v432 = vld [vmem:[%s391 + $0xa2] sm:$0xff]
  %v433 = vld [vmem:[%s391 + $0xb2] sm:$0xff]
  %v434 = vld [vmem:[%s391 + $0xc2] sm:$0xff]
  %v435 = vld [vmem:[%s391 + $0xd2] sm:$0xff]
  %v436 = vld [vmem:[%s391 + $0xe2] sm:$0xff]
  %v437 = vld [vmem:[%s391 + $0xf2] sm:$0xff]
  %v438 = vld [vmem:[%s391 + $0x102] sm:$0xff]
  %v439 = vld [vmem:[%s391 + $0x112] sm:$0xff]
  %456 = vrot.lane.b32.xlu0 %v311, 8
  %v457 = vpop.permute.xlu0 %456
  %458 = vrot.lane.b32.xlu0 %v312, 8
  %v459 = vpop.permute.xlu0 %458
  %460 = vrot.lane.b32.xlu0 %v313, 8
  %v461 = vpop.permute.xlu0 %460
  %462 = vrot.lane.b32.xlu0 %v314, 8
  %v463 = vpop.permute.xlu0 %462
  %464 = vrot.lane.b32.xlu0 %v315, 8
  %v465 = vpop.permute.xlu0 %464
  %466 = vrot.lane.b32.xlu0 %v316, 8
  %v467 = vpop.permute.xlu0 %466
  %468 = vrot.lane.b32.xlu0 %v317, 8
  %v469 = vpop.permute.xlu0 %468
  %470 = vrot.lane.b32.xlu0 %v318, 8
  %v471 = vpop.permute.xlu0 %470
  %472 = vrot.lane.b32.xlu0 %v319, 8
  %v473 = vpop.permute.xlu0 %472
  %474 = vrot.lane.b32.xlu0 %v320, 8
  %v475 = vpop.permute.xlu0 %474
  %476 = vrot.lane.b32.xlu0 %v321, 8
  %v477 = vpop.permute.xlu0 %476
  %478 = vrot.lane.b32.xlu0 %v322, 8
  %v479 = vpop.permute.xlu0 %478
  %480 = vrot.lane.b32.xlu0 %v323, 8
  %v481 = vpop.permute.xlu0 %480
  %482 = vrot.lane.b32.xlu0 %v324, 8
  %v483 = vpop.permute.xlu0 %482
  %484 = vrot.lane.b32.xlu0 %v325, 8
  %v485 = vpop.permute.xlu0 %484
  %486 = vrot.lane.b32.xlu0 %v326, 8
  %v487 = vpop.permute.xlu0 %486
  %520 = vrot.lane.b32.xlu0 %v327, 16
  %v521 = vpop.permute.xlu0 %520
  %522 = vrot.lane.b32.xlu0 %v328, 16
  %v523 = vpop.permute.xlu0 %522
  %524 = vrot.lane.b32.xlu0 %v329, 16
  %v525 = vpop.permute.xlu0 %524
  %526 = vrot.lane.b32.xlu0 %v330, 16
  %v527 = vpop.permute.xlu0 %526
  %528 = vrot.lane.b32.xlu0 %v331, 16
  %v529 = vpop.permute.xlu0 %528
  %530 = vrot.lane.b32.xlu0 %v332, 16
  %v531 = vpop.permute.xlu0 %530
  %532 = vrot.lane.b32.xlu0 %v333, 16
  %v533 = vpop.permute.xlu0 %532
  %534 = vrot.lane.b32.xlu0 %v334, 16
  %v535 = vpop.permute.xlu0 %534
  %536 = vrot.lane.b32.xlu0 %v335, 16
  %v537 = vpop.permute.xlu0 %536
  %538 = vrot.lane.b32.xlu0 %v336, 16
  %v539 = vpop.permute.xlu0 %538
  %540 = vrot.lane.b32.xlu0 %v337, 16
  %v541 = vpop.permute.xlu0 %540
  %542 = vrot.lane.b32.xlu0 %v338, 16
  %v543 = vpop.permute.xlu0 %542
  %544 = vrot.lane.b32.xlu0 %v339, 16
  %v545 = vpop.permute.xlu0 %544
  %546 = vrot.lane.b32.xlu0 %v340, 16
  %v547 = vpop.permute.xlu0 %546
  %548 = vrot.lane.b32.xlu0 %v341, 16
  %v549 = vpop.permute.xlu0 %548
  %550 = vrot.lane.b32.xlu0 %v342, 16
  %v551 = vpop.permute.xlu0 %550
  %584 = vrot.lane.b32.xlu0 %v343, 24
  %v585 = vpop.permute.xlu0 %584
  %586 = vrot.lane.b32.xlu0 %v344, 24
  %v587 = vpop.permute.xlu0 %586
  %588 = vrot.lane.b32.xlu0 %v345, 24
  %v589 = vpop.permute.xlu0 %588
  %590 = vrot.lane.b32.xlu0 %v346, 24
  %v591 = vpop.permute.xlu0 %590
  %592 = vrot.lane.b32.xlu0 %v347, 24
  %v593 = vpop.permute.xlu0 %592
  %594 = vrot.lane.b32.xlu0 %v348, 24
  %v595 = vpop.permute.xlu0 %594
  %596 = vrot.lane.b32.xlu0 %v349, 24
  %v597 = vpop.permute.xlu0 %596
  %598 = vrot.lane.b32.xlu0 %v350, 24
  %v599 = vpop.permute.xlu0 %598
  %600 = vrot.lane.b32.xlu0 %v351, 24
  %v601 = vpop.permute.xlu0 %600
  %602 = vrot.lane.b32.xlu0 %v352, 24
  %v603 = vpop.permute.xlu0 %602
  %604 = vrot.lane.b32.xlu0 %v353, 24
  %v605 = vpop.permute.xlu0 %604
  %606 = vrot.lane.b32.xlu0 %v354, 24
  %v607 = vpop.permute.xlu0 %606
  %608 = vrot.lane.b32.xlu0 %v355, 24
  %v609 = vpop.permute.xlu0 %608
  %610 = vrot.lane.b32.xlu0 %v356, 24
  %v611 = vpop.permute.xlu0 %610
  %612 = vrot.lane.b32.xlu0 %v357, 24
  %v613 = vpop.permute.xlu0 %612
  %614 = vrot.lane.b32.xlu0 %v358, 24
  %v615 = vpop.permute.xlu0 %614
  %648 = vrot.lane.b32.xlu0 %v359, 32
  %v649 = vpop.permute.xlu0 %648
  %650 = vrot.lane.b32.xlu0 %v360, 32
  %v651 = vpop.permute.xlu0 %650
  %652 = vrot.lane.b32.xlu0 %v361, 32
  %v653 = vpop.permute.xlu0 %652
  %654 = vrot.lane.b32.xlu0 %v362, 32
  %v655 = vpop.permute.xlu0 %654
  %656 = vrot.lane.b32.xlu0 %v363, 32
  %v657 = vpop.permute.xlu0 %656
  %658 = vrot.lane.b32.xlu0 %v364, 32
  %v659 = vpop.permute.xlu0 %658
  %660 = vrot.lane.b32.xlu0 %v365, 32
  %v661 = vpop.permute.xlu0 %660
  %662 = vrot.lane.b32.xlu0 %v366, 32
  %v663 = vpop.permute.xlu0 %662
  %664 = vrot.lane.b32.xlu0 %v367, 32
  %v665 = vpop.permute.xlu0 %664
  %666 = vrot.lane.b32.xlu0 %v368, 32
  %v667 = vpop.permute.xlu0 %666
  %668 = vrot.lane.b32.xlu0 %v369, 32
  %v669 = vpop.permute.xlu0 %668
  %670 = vrot.lane.b32.xlu0 %v370, 32
  %v671 = vpop.permute.xlu0 %670
  %672 = vrot.lane.b32.xlu0 %v371, 32
  %v673 = vpop.permute.xlu0 %672
  %674 = vrot.lane.b32.xlu0 %v372, 32
  %v675 = vpop.permute.xlu0 %674
  %676 = vrot.lane.b32.xlu0 %v373, 32
  %v677 = vpop.permute.xlu0 %676
  %678 = vrot.lane.b32.xlu0 %v374, 32
  %v679 = vpop.permute.xlu0 %678
  %712 = vrot.lane.b32.xlu0 %v375, 40
  %v713 = vpop.permute.xlu0 %712
  %714 = vrot.lane.b32.xlu0 %v376, 40
  %v715 = vpop.permute.xlu0 %714
  %716 = vrot.lane.b32.xlu0 %v377, 40
  %v717 = vpop.permute.xlu0 %716
  %718 = vrot.lane.b32.xlu0 %v378, 40
  %v719 = vpop.permute.xlu0 %718
  %720 = vrot.lane.b32.xlu0 %v379, 40
  %v721 = vpop.permute.xlu0 %720
  %722 = vrot.lane.b32.xlu0 %v380, 40
  %v723 = vpop.permute.xlu0 %722
  %724 = vrot.lane.b32.xlu0 %v381, 40
  %v725 = vpop.permute.xlu0 %724
  %726 = vrot.lane.b32.xlu0 %v382, 40
  %v727 = vpop.permute.xlu0 %726
  %728 = vrot.lane.b32.xlu0 %v383, 40
  %v729 = vpop.permute.xlu0 %728
  %730 = vrot.lane.b32.xlu0 %v384, 40
  %v731 = vpop.permute.xlu0 %730
  %732 = vrot.lane.b32.xlu0 %v385, 40
  %v733 = vpop.permute.xlu0 %732
  %734 = vrot.lane.b32.xlu0 %v386, 40
  %v735 = vpop.permute.xlu0 %734
  %736 = vrot.lane.b32.xlu0 %v387, 40
  %v737 = vpop.permute.xlu0 %736
  %738 = vrot.lane.b32.xlu0 %v388, 40
  %v739 = vpop.permute.xlu0 %738
  %740 = vrot.lane.b32.xlu0 %v389, 40
  %v741 = vpop.permute.xlu0 %740
  %742 = vrot.lane.b32.xlu0 %v390, 40
  %v743 = vpop.permute.xlu0 %742
  %776 = vrot.lane.b32.xlu0 %v392, 48
  %v777 = vpop.permute.xlu0 %776
  %778 = vrot.lane.b32.xlu0 %v393, 48
  %v779 = vpop.permute.xlu0 %778
  %780 = vrot.lane.b32.xlu0 %v394, 48
  %v781 = vpop.permute.xlu0 %780
  %782 = vrot.lane.b32.xlu0 %v395, 48
  %v783 = vpop.permute.xlu0 %782
  %784 = vrot.lane.b32.xlu0 %v396, 48
  %v785 = vpop.permute.xlu0 %784
  %786 = vrot.lane.b32.xlu0 %v397, 48
  %v787 = vpop.permute.xlu0 %786
  %788 = vrot.lane.b32.xlu0 %v398, 48
  %v789 = vpop.permute.xlu0 %788
  %790 = vrot.lane.b32.xlu0 %v399, 48
  %v791 = vpop.permute.xlu0 %790
  %792 = vrot.lane.b32.xlu0 %v400, 48
  %v793 = vpop.permute.xlu0 %792
  %794 = vrot.lane.b32.xlu0 %v401, 48
  %v795 = vpop.permute.xlu0 %794
  %796 = vrot.lane.b32.xlu0 %v402, 48
  %v797 = vpop.permute.xlu0 %796
  %798 = vrot.lane.b32.xlu0 %v403, 48
  %v799 = vpop.permute.xlu0 %798
  %800 = vrot.lane.b32.xlu0 %v404, 48
  %v801 = vpop.permute.xlu0 %800
  %802 = vrot.lane.b32.xlu0 %v405, 48
  %v803 = vpop.permute.xlu0 %802
  %804 = vrot.lane.b32.xlu0 %v406, 48
  %v805 = vpop.permute.xlu0 %804
  %806 = vrot.lane.b32.xlu0 %v407, 48
  %v807 = vpop.permute.xlu0 %806
  %840 = vrot.lane.b32.xlu0 %v408, 56
  %v841 = vpop.permute.xlu0 %840
  %842 = vrot.lane.b32.xlu0 %v409, 56
  %v843 = vpop.permute.xlu0 %842
  %844 = vrot.lane.b32.xlu0 %v410, 56
  %v845 = vpop.permute.xlu0 %844
  %846 = vrot.lane.b32.xlu0 %v411, 56
  %v847 = vpop.permute.xlu0 %846
  %848 = vrot.lane.b32.xlu0 %v412, 56
  %v849 = vpop.permute.xlu0 %848
  %850 = vrot.lane.b32.xlu0 %v413, 56
  %v851 = vpop.permute.xlu0 %850
  %852 = vrot.lane.b32.xlu0 %v414, 56
  %v853 = vpop.permute.xlu0 %852
  %854 = vrot.lane.b32.xlu0 %v415, 56
  %v855 = vpop.permute.xlu0 %854
  %856 = vrot.lane.b32.xlu0 %v416, 56
  %v857 = vpop.permute.xlu0 %856
  %858 = vrot.lane.b32.xlu0 %v417, 56
  %v859 = vpop.permute.xlu0 %858
  %860 = vrot.lane.b32.xlu0 %v418, 56
  %v861 = vpop.permute.xlu0 %860
  %862 = vrot.lane.b32.xlu0 %v419, 56
  %v863 = vpop.permute.xlu0 %862
  %864 = vrot.lane.b32.xlu0 %v420, 56
  %v865 = vpop.permute.xlu0 %864
  %866 = vrot.lane.b32.xlu0 %v421, 56
  %v867 = vpop.permute.xlu0 %866
  %868 = vrot.lane.b32.xlu0 %v422, 56
  %v869 = vpop.permute.xlu0 %868
  %870 = vrot.lane.b32.xlu0 %v423, 56
  %v871 = vpop.permute.xlu0 %870
  %904 = vrot.lane.b32.xlu0 %v424, 64
  %v905 = vpop.permute.xlu0 %904
  %906 = vrot.lane.b32.xlu0 %v425, 64
  %v907 = vpop.permute.xlu0 %906
  %908 = vrot.lane.b32.xlu0 %v426, 64
  %v909 = vpop.permute.xlu0 %908
  %910 = vrot.lane.b32.xlu0 %v427, 64
  %v911 = vpop.permute.xlu0 %910
  %912 = vrot.lane.b32.xlu0 %v428, 64
  %v913 = vpop.permute.xlu0 %912
  %914 = vrot.lane.b32.xlu0 %v429, 64
  %v915 = vpop.permute.xlu0 %914
  %916 = vrot.lane.b32.xlu0 %v430, 64
  %v917 = vpop.permute.xlu0 %916
  %918 = vrot.lane.b32.xlu0 %v431, 64
  %v919 = vpop.permute.xlu0 %918
  %920 = vrot.lane.b32.xlu0 %v432, 64
  %v921 = vpop.permute.xlu0 %920
  %922 = vrot.lane.b32.xlu0 %v433, 64
  %v923 = vpop.permute.xlu0 %922
  %924 = vrot.lane.b32.xlu0 %v434, 64
  %v925 = vpop.permute.xlu0 %924
  %926 = vrot.lane.b32.xlu0 %v435, 64
  %v927 = vpop.permute.xlu0 %926
  %928 = vrot.lane.b32.xlu0 %v436, 64
  %v929 = vpop.permute.xlu0 %928
  %930 = vrot.lane.b32.xlu0 %v437, 64
  %v931 = vpop.permute.xlu0 %930
  %932 = vrot.lane.b32.xlu0 %v438, 64
  %v933 = vpop.permute.xlu0 %932
  %934 = vrot.lane.b32.xlu0 %v439, 64
  %v935 = vpop.permute.xlu0 %934
  %v952 = vsel %vm236, %v295, %v457
  %v953 = vsel %vm236, %v296, %v459
  %v954 = vsel %vm236, %v297, %v461
  %v955 = vsel %vm236, %v298, %v463
  %v956 = vsel %vm236, %v299, %v465
  %v957 = vsel %vm236, %v300, %v467
  %v958 = vsel %vm236, %v301, %v469
  %v959 = vsel %vm236, %v302, %v471
  %v960 = vsel %vm236, %v303, %v473
  %v961 = vsel %vm236, %v304, %v475
  %v962 = vsel %vm236, %v305, %v477
  %v963 = vsel %vm236, %v306, %v479
  %v964 = vsel %vm236, %v307, %v481
  %v965 = vsel %vm236, %v308, %v483
  %v966 = vsel %vm236, %v309, %v485
  %v967 = vsel %vm236, %v310, %v487
  %vm968 = vcmask 130048
  %v969 = vsel %vm968, %v952, %v521
  %v970 = vsel %vm968, %v953, %v523
  %v971 = vsel %vm968, %v954, %v525
  %v972 = vsel %vm968, %v955, %v527
  %v973 = vsel %vm968, %v956, %v529
  %v974 = vsel %vm968, %v957, %v531
  %v975 = vsel %vm968, %v958, %v533
  %v976 = vsel %vm968, %v959, %v535
  %v977 = vsel %vm968, %v960, %v537
  %v978 = vsel %vm968, %v961, %v539
  %v979 = vsel %vm968, %v962, %v541
  %v980 = vsel %vm968, %v963, %v543
  %v981 = vsel %vm968, %v964, %v545
  %v982 = vsel %vm968, %v965, %v547
  %v983 = vsel %vm968, %v966, %v549
  %v984 = vsel %vm968, %v967, %v551
  %vm985 = vcmask 195584
  %v986 = vsel %vm985, %v969, %v585
  %v987 = vsel %vm985, %v970, %v587
  %v988 = vsel %vm985, %v971, %v589
  %v989 = vsel %vm985, %v972, %v591
  %v990 = vsel %vm985, %v973, %v593
  %v991 = vsel %vm985, %v974, %v595
  %v992 = vsel %vm985, %v975, %v597
  %v993 = vsel %vm985, %v976, %v599
  %v994 = vsel %vm985, %v977, %v601
  %v995 = vsel %vm985, %v978, %v603
  %v996 = vsel %vm985, %v979, %v605
  %v997 = vsel %vm985, %v980, %v607
  %v998 = vsel %vm985, %v981, %v609
  %v999 = vsel %vm985, %v982, %v611
  %v1000 = vsel %vm985, %v983, %v613
  %v1001 = vsel %vm985, %v984, %v615
  %vm1002 = vcmask 261120
  %v1003 = vsel %vm1002, %v986, %v649
  %v1004 = vsel %vm1002, %v987, %v651
  %v1005 = vsel %vm1002, %v988, %v653
  %v1006 = vsel %vm1002, %v989, %v655
  %v1007 = vsel %vm1002, %v990, %v657
  %v1008 = vsel %vm1002, %v991, %v659
  %v1009 = vsel %vm1002, %v992, %v661
  %v1010 = vsel %vm1002, %v993, %v663
  %v1011 = vsel %vm1002, %v994, %v665
  %v1012 = vsel %vm1002, %v995, %v667
  %v1013 = vsel %vm1002, %v996, %v669
  %v1014 = vsel %vm1002, %v997, %v671
  %v1015 = vsel %vm1002, %v998, %v673
  %v1016 = vsel %vm1002, %v999, %v675
  %v1017 = vsel %vm1002, %v1000, %v677
  %v1018 = vsel %vm1002, %v1001, %v679
  %vm1019 = vcmask 326656
  %v1020 = vsel %vm1019, %v1003, %v713
  %v1021 = vsel %vm1019, %v1004, %v715
  %v1022 = vsel %vm1019, %v1005, %v717
  %v1023 = vsel %vm1019, %v1006, %v719
  %v1024 = vsel %vm1019, %v1007, %v721
  %v1025 = vsel %vm1019, %v1008, %v723
  %v1026 = vsel %vm1019, %v1009, %v725
  %v1027 = vsel %vm1019, %v1010, %v727
  %v1028 = vsel %vm1019, %v1011, %v729
  %v1029 = vsel %vm1019, %v1012, %v731
  %v1030 = vsel %vm1019, %v1013, %v733
  %v1031 = vsel %vm1019, %v1014, %v735
  %v1032 = vsel %vm1019, %v1015, %v737
  %v1033 = vsel %vm1019, %v1016, %v739
  %v1034 = vsel %vm1019, %v1017, %v741
  %v1035 = vsel %vm1019, %v1018, %v743
  %vm1036 = vcmask 392192
  %v1037 = vsel %vm1036, %v1020, %v777
  %v1038 = vsel %vm1036, %v1021, %v779
  %v1039 = vsel %vm1036, %v1022, %v781
  %v1040 = vsel %vm1036, %v1023, %v783
  %v1041 = vsel %vm1036, %v1024, %v785
  %v1042 = vsel %vm1036, %v1025, %v787
  %v1043 = vsel %vm1036, %v1026, %v789
  %v1044 = vsel %vm1036, %v1027, %v791
  %v1045 = vsel %vm1036, %v1028, %v793
  %v1046 = vsel %vm1036, %v1029, %v795
  %v1047 = vsel %vm1036, %v1030, %v797
  %v1048 = vsel %vm1036, %v1031, %v799
  %v1049 = vsel %vm1036, %v1032, %v801
  %v1050 = vsel %vm1036, %v1033, %v803
  %v1051 = vsel %vm1036, %v1034, %v805
  %v1052 = vsel %vm1036, %v1035, %v807
  %vm1053 = vcmask 457728
  %v1054 = vsel %vm1053, %v1037, %v841
  %v1055 = vsel %vm1053, %v1038, %v843
  %v1056 = vsel %vm1053, %v1039, %v845
  %v1057 = vsel %vm1053, %v1040, %v847
  %v1058 = vsel %vm1053, %v1041, %v849
  %v1059 = vsel %vm1053, %v1042, %v851
  %v1060 = vsel %vm1053, %v1043, %v853
  %v1061 = vsel %vm1053, %v1044, %v855
  %v1062 = vsel %vm1053, %v1045, %v857
  %v1063 = vsel %vm1053, %v1046, %v859
  %v1064 = vsel %vm1053, %v1047, %v861
  %v1065 = vsel %vm1053, %v1048, %v863
  %v1066 = vsel %vm1053, %v1049, %v865
  %v1067 = vsel %vm1053, %v1050, %v867
  %v1068 = vsel %vm1053, %v1051, %v869
  %v1069 = vsel %vm1053, %v1052, %v871
  %vm1070 = vcmask 523264
  %v1071 = vsel %vm1070, %v1054, %v905
  %v1072 = vsel %vm1070, %v1055, %v907
  %v1073 = vsel %vm1070, %v1056, %v909
  %v1074 = vsel %vm1070, %v1057, %v911
  %v1075 = vsel %vm1070, %v1058, %v913
  %v1076 = vsel %vm1070, %v1059, %v915
  %v1077 = vsel %vm1070, %v1060, %v917
  %v1078 = vsel %vm1070, %v1061, %v919
  %v1079 = vsel %vm1070, %v1062, %v921
  %v1080 = vsel %vm1070, %v1063, %v923
  %v1081 = vsel %vm1070, %v1064, %v925
  %v1082 = vsel %vm1070, %v1065, %v927
  %v1083 = vsel %vm1070, %v1066, %v929
  %v1084 = vsel %vm1070, %v1067, %v931
  %v1085 = vsel %vm1070, %v1068, %v933
  %v1086 = vsel %vm1070, %v1069, %v935
  %v1087 = vpack.c.bf16 %v1072, %v1071
  %v1088 = vpack.c.bf16 %v1074, %v1073
  %v1089 = vpack.c.bf16 %v1076, %v1075
  %v1090 = vpack.c.bf16 %v1078, %v1077
  %v1091 = vpack.c.bf16 %v1080, %v1079
  %v1092 = vpack.c.bf16 %v1082, %v1081
  %v1093 = vpack.c.bf16 %v1084, %v1083
  %v1094 = vpack.c.bf16 %v1086, %v1085
  %v1095 = vld [vmem:[%s3] sm:$0xf]
  %v1096 = vld [vmem:[%s3 + $0x4] sm:$0xf]
  %v1097 = vld [vmem:[%s3 + $0x8] sm:$0xf]
  %v1098 = vld [vmem:[%s3 + $0xc] sm:$0xf]
  %v1099 = vld [vmem:[%s3 + $0x10] sm:$0xf]
  %v1100 = vld [vmem:[%s3 + $0x14] sm:$0xf]
  %v1101 = vld [vmem:[%s3 + $0x18] sm:$0xf]
  %v1102 = vld [vmem:[%s3 + $0x1c] sm:$0xf]
  %v1103 = vld [vmem:[%s3 + $0x20] sm:$0xf]
  %v1104 = vld [vmem:[%s4] sm:$0x1]
  %v1106 = vlaneseq
  %v1107 = vshrl.u32 %v1106, 7
  %v1108 = vsub.s32 0, %v1107
  %v1109 = vrot.slane %v1104, %v1108
  %v1120 = vunpack.c.l.b16 %v1095
  %v1121 = vunpack.c.l.b16 %v1096
  %v1122 = vunpack.c.l.b16 %v1097
  %v1123 = vunpack.c.l.b16 %v1098
  %v1124 = vunpack.c.l.b16 %v1099
  %v1125 = vunpack.c.l.b16 %v1100
  %v1126 = vunpack.c.l.b16 %v1101
  %v1127 = vunpack.c.l.b16 %v1102
  %v1128 = vunpack.c.l.b16 %v1103
  %v1129 = vpack.c.b16 %v1121, %v1120
  %v1130 = vpack.c.b16 %v1123, %v1122
  %v1131 = vpack.c.b16 %v1125, %v1124
  %v1132 = vpack.c.b16 %v1127, %v1126
  %v1133 = vpack.c.b16 %v1128, %v1128
  %vm1138 = vcmask 588800
  %v1140 = vsel %vm1138, %v1087, 0
  %v1143 = vsel %vm1138, %v1088, 0
  %v1146 = vsel %vm1138, %v1089, 0
  %v1149 = vsel %vm1138, %v1090, 0
  %v1152 = vsel %vm1138, %v1091, 0
  %v1155 = vsel %vm1138, %v1092, 0
  %v1158 = vsel %vm1138, %v1093, 0
  %v1161 = vsel %vm1138, %v1094, 0
  %vm1163 = vcmask 1043456
  %v1165 = vsel %vm1163, %v1133, 0
  %1167 = vmatprep.subr.bf16.mxu0 0
  %1168 = vmatpush1.bf16.msra.mxu0 0
  %1169 = vmatprep.subr.bf16.mxu0 0
  %1170 = vmatpush1.bf16.msra.mxu0 0
  %1171 = vmatprep.subr.bf16.mxu0 0
  %1172 = vmatpush1.bf16.msra.mxu0 0
  %1173 = vmatprep.subr.bf16.mxu0 0
  %1174 = vmatpush1.bf16.msra.mxu0 %v1165
  %1175 = vmatprep.subr.bf16.mxu0 0
  %1176 = vmatpush1.bf16.msra.mxu0 %v1132
  %1177 = vmatprep.subr.bf16.mxu0 0
  %1178 = vmatpush1.bf16.msra.mxu0 %v1131
  %1179 = vmatprep.subr.bf16.mxu0 0
  %1180 = vmatpush1.bf16.msra.mxu0 %v1130
  %1181 = vmatprep.subr.bf16.mxu0 0
  %1182 = vmatpush1.bf16.msra.mxu0 %v1129
  %1183 = vmatprep.subr.bf16.mxu0 0
  %1184 = vmatpush2.bf16.msra.mxu0 0
  %1185 = vmatprep.subr.bf16.mxu0 0
  %1186 = vmatpush2.bf16.msra.mxu0 0
  %1187 = vmatprep.subr.bf16.mxu0 0
  %1188 = vmatpush2.bf16.msra.mxu0 0
  %1189 = vmatprep.subr.bf16.mxu0 0
  %1190 = vmatpush2.bf16.msra.mxu0 0
  %1191 = vmatprep.subr.bf16.mxu0 0
  %1192 = vmatpush2.bf16.msra.mxu0 0
  %1193 = vmatprep.subr.bf16.mxu0 0
  %1194 = vmatpush2.bf16.msra.mxu0 0
  %1195 = vmatprep.subr.bf16.mxu0 0
  %1196 = vmatpush2.bf16.msra.mxu0 0
  %1197 = vmatprep.subr.bf16.mxu0 0
  %1198 = vmatpush2.bf16.msra.mxu0 0
  %1199 = vmatprep.mubr.bf16.mxu0 0
  %1200 = vmatmul.mubr.bf16.gmra.mxu0 %v1140
  %v1201 = vpop.f32.mrf.mxu0
  %v1202 = vadd.f32 %v1109, %v1201
  %v1203 = vpop.f32.mrf.mxu0
  %v1204 = vpop.f32.mrf.mxu0
  %v1205 = vadd.f32 %v1109, %v1204
  %v1206 = vpop.f32.mrf.mxu0
  %1207 = vmatprep.mubr.bf16.mxu0 0
  %1208 = vmatmul.mubr.bf16.gmra.mxu0 %v1143
  %v1209 = vpop.f32.mrf.mxu0
  %v1210 = vadd.f32 %v1109, %v1209
  %v1211 = vpop.f32.mrf.mxu0
  %v1212 = vpop.f32.mrf.mxu0
  %v1213 = vadd.f32 %v1109, %v1212
  %v1214 = vpop.f32.mrf.mxu0
  %1215 = vmatprep.mubr.bf16.mxu0 0
  %1216 = vmatmul.mubr.bf16.gmra.mxu0 %v1146
  %v1217 = vpop.f32.mrf.mxu0
  %v1218 = vadd.f32 %v1109, %v1217
  %v1219 = vpop.f32.mrf.mxu0
  %v1220 = vpop.f32.mrf.mxu0
  %v1221 = vadd.f32 %v1109, %v1220
  %v1222 = vpop.f32.mrf.mxu0
  %1223 = vmatprep.mubr.bf16.mxu0 0
  %1224 = vmatmul.mubr.bf16.gmra.mxu0 %v1149
  %v1225 = vpop.f32.mrf.mxu0
  %v1226 = vadd.f32 %v1109, %v1225
  %v1227 = vpop.f32.mrf.mxu0
  %v1228 = vpop.f32.mrf.mxu0
  %v1229 = vadd.f32 %v1109, %v1228
  %v1230 = vpop.f32.mrf.mxu0
  %1231 = vmatprep.mubr.bf16.mxu0 0
  %1232 = vmatmul.mubr.bf16.gmra.mxu0 %v1152
  %v1233 = vpop.f32.mrf.mxu0
  %v1234 = vadd.f32 %v1109, %v1233
  %v1235 = vpop.f32.mrf.mxu0
  %v1236 = vpop.f32.mrf.mxu0
  %v1237 = vadd.f32 %v1109, %v1236
  %v1238 = vpop.f32.mrf.mxu0
  %1239 = vmatprep.mubr.bf16.mxu0 0
  %1240 = vmatmul.mubr.bf16.gmra.mxu0 %v1155
  %v1241 = vpop.f32.mrf.mxu0
  %v1242 = vadd.f32 %v1109, %v1241
  %v1243 = vpop.f32.mrf.mxu0
  %v1244 = vpop.f32.mrf.mxu0
  %v1245 = vadd.f32 %v1109, %v1244
  %v1246 = vpop.f32.mrf.mxu0
  %1247 = vmatprep.mubr.bf16.mxu0 0
  %1248 = vmatmul.mubr.bf16.gmra.mxu0 %v1158
  %v1249 = vpop.f32.mrf.mxu0
  %v1250 = vadd.f32 %v1109, %v1249
  %v1251 = vpop.f32.mrf.mxu0
  %v1252 = vpop.f32.mrf.mxu0
  %v1253 = vadd.f32 %v1109, %v1252
  %v1254 = vpop.f32.mrf.mxu0
  %1255 = vmatprep.mubr.bf16.mxu0 0
  %1256 = vmatmul.mubr.bf16.gmra.mxu0 %v1161
  %v1257 = vpop.f32.mrf.mxu0
  %v1258 = vadd.f32 %v1109, %v1257
  %v1259 = vpop.f32.mrf.mxu0
  %v1260 = vpop.f32.mrf.mxu0
  %v1261 = vadd.f32 %v1109, %v1260
  %v1262 = vpop.f32.mrf.mxu0
  %1263 = vdwg.mxu0
  %v1264 = vsel %vm236, %v1202, 0.0
  %v1265 = vsel %vm236, %v1205, 0.0
  %v1266 = vadd.f32 %v1264, %v1265
  %v1267 = vsel %vm236, %v1210, 0.0
  %v1268 = vadd.f32 %v1266, %v1267
  %v1269 = vsel %vm236, %v1213, 0.0
  %v1270 = vadd.f32 %v1268, %v1269
  %v1271 = vsel %vm236, %v1218, 0.0
  %v1272 = vadd.f32 %v1270, %v1271
  %v1273 = vsel %vm236, %v1221, 0.0
  %v1274 = vadd.f32 %v1272, %v1273
  %v1275 = vsel %vm236, %v1226, 0.0
  %v1276 = vadd.f32 %v1274, %v1275
  %v1277 = vsel %vm236, %v1229, 0.0
  %v1278 = vadd.f32 %v1276, %v1277
  %v1279 = vsel %vm236, %v1234, 0.0
  %v1280 = vadd.f32 %v1278, %v1279
  %v1281 = vsel %vm236, %v1237, 0.0
  %v1282 = vadd.f32 %v1280, %v1281
  %v1283 = vsel %vm236, %v1242, 0.0
  %v1284 = vadd.f32 %v1282, %v1283
  %v1285 = vsel %vm236, %v1245, 0.0
  %v1286 = vadd.f32 %v1284, %v1285
  %v1287 = vsel %vm236, %v1250, 0.0
  %v1288 = vadd.f32 %v1286, %v1287
  %v1289 = vsel %vm236, %v1253, 0.0
  %v1290 = vadd.f32 %v1288, %v1289
  %v1291 = vsel %vm236, %v1258, 0.0
  %v1292 = vadd.f32 %v1290, %v1291
  %v1293 = vsel %vm236, %v1261, 0.0
  %v1294 = vadd.f32 %v1292, %v1293
  %v1295 = vrot.slane %v1294, 4
  %v1296 = vadd.f32 %v1294, %v1295
  %v1297 = vrot.slane %v1296, 2
  %v1298 = vadd.f32 %v1296, %v1297
  %v1299 = vrot.slane %v1298, 1
  %v1300 = vadd.f32 %v1298, %v1299
  %v1301 = vmul.f32 %v1300, 0.0078125
  %v1302 = vsub.f32 %v1202, %v1301
  %v1303 = vsub.f32 %v1205, %v1301
  %v1304 = vsub.f32 %v1210, %v1301
  %v1305 = vsub.f32 %v1213, %v1301
  %v1306 = vsub.f32 %v1218, %v1301
  %v1307 = vsub.f32 %v1221, %v1301
  %v1308 = vsub.f32 %v1226, %v1301
  %v1309 = vsub.f32 %v1229, %v1301
  %v1310 = vsub.f32 %v1234, %v1301
  %v1311 = vsub.f32 %v1237, %v1301
  %v1312 = vsub.f32 %v1242, %v1301
  %v1313 = vsub.f32 %v1245, %v1301
  %v1314 = vsub.f32 %v1250, %v1301
  %v1315 = vsub.f32 %v1253, %v1301
  %v1316 = vsub.f32 %v1258, %v1301
  %v1317 = vsub.f32 %v1261, %v1301
  %v1318 = vmul.f32 %v1302, %v1302
  %v1319 = vmul.f32 %v1303, %v1303
  %v1320 = vmul.f32 %v1304, %v1304
  %v1321 = vmul.f32 %v1305, %v1305
  %v1322 = vmul.f32 %v1306, %v1306
  %v1323 = vmul.f32 %v1307, %v1307
  %v1324 = vmul.f32 %v1308, %v1308
  %v1325 = vmul.f32 %v1309, %v1309
  %v1326 = vmul.f32 %v1310, %v1310
  %v1327 = vmul.f32 %v1311, %v1311
  %v1328 = vmul.f32 %v1312, %v1312
  %v1329 = vmul.f32 %v1313, %v1313
  %v1330 = vmul.f32 %v1314, %v1314
  %v1331 = vmul.f32 %v1315, %v1315
  %v1332 = vmul.f32 %v1316, %v1316
  %v1333 = vmul.f32 %v1317, %v1317
  %v1334 = vsel %vm236, %v1318, 0.0
  %v1335 = vsel %vm236, %v1319, 0.0
  %v1336 = vadd.f32 %v1334, %v1335
  %v1337 = vsel %vm236, %v1320, 0.0
  %v1338 = vadd.f32 %v1336, %v1337
  %v1339 = vsel %vm236, %v1321, 0.0
  %v1340 = vadd.f32 %v1338, %v1339
  %v1341 = vsel %vm236, %v1322, 0.0
  %v1342 = vadd.f32 %v1340, %v1341
  %v1343 = vsel %vm236, %v1323, 0.0
  %v1344 = vadd.f32 %v1342, %v1343
  %v1345 = vsel %vm236, %v1324, 0.0
  %v1346 = vadd.f32 %v1344, %v1345
  %v1347 = vsel %vm236, %v1325, 0.0
  %v1348 = vadd.f32 %v1346, %v1347
  %v1349 = vsel %vm236, %v1326, 0.0
  %v1350 = vadd.f32 %v1348, %v1349
  %v1351 = vsel %vm236, %v1327, 0.0
  %v1352 = vadd.f32 %v1350, %v1351
  %v1353 = vsel %vm236, %v1328, 0.0
  %v1354 = vadd.f32 %v1352, %v1353
  %v1355 = vsel %vm236, %v1329, 0.0
  %v1356 = vadd.f32 %v1354, %v1355
  %v1357 = vsel %vm236, %v1330, 0.0
  %v1358 = vadd.f32 %v1356, %v1357
  %v1359 = vsel %vm236, %v1331, 0.0
  %v1360 = vadd.f32 %v1358, %v1359
  %v1361 = vsel %vm236, %v1332, 0.0
  %v1362 = vadd.f32 %v1360, %v1361
  %v1363 = vsel %vm236, %v1333, 0.0
  %v1364 = vadd.f32 %v1362, %v1363
  %v1365 = vrot.slane %v1364, 4
  %v1366 = vadd.f32 %v1364, %v1365
  %v1367 = vrot.slane %v1366, 2
  %v1368 = vadd.f32 %v1366, %v1367
  %v1369 = vrot.slane %v1368, 1
  %v1370 = vadd.f32 %v1368, %v1369
  %v1371 = vmul.f32 %v1370, 0.0078125
  %v1372 = vld [vmem:[%s5] sm:$0x1]
  %v1373 = vadd.f32 %v1371, 1e-05
  %v1374 = vrsqrt.pop %v1373
  %v1375 = vmul.f32 %v1372, %v1374
  %v1377 = vlaneseq
  %v1378 = vshrl.u32 %v1377, 7
  %v1379 = vsub.s32 0, %v1378
  %v1380 = vrot.slane %v1375, %v1379
  %v1382 = vmul.f32 %v1302, %v1380
  %v1383 = vmul.f32 %v1303, %v1380
  %v1384 = vmul.f32 %v1304, %v1380
  %v1385 = vmul.f32 %v1305, %v1380
  %v1386 = vmul.f32 %v1306, %v1380
  %v1387 = vmul.f32 %v1307, %v1380
  %v1388 = vmul.f32 %v1308, %v1380
  %v1389 = vmul.f32 %v1309, %v1380
  %v1390 = vmul.f32 %v1310, %v1380
  %v1391 = vmul.f32 %v1311, %v1380
  %v1392 = vmul.f32 %v1312, %v1380
  %v1393 = vmul.f32 %v1313, %v1380
  %v1394 = vmul.f32 %v1314, %v1380
  %v1395 = vmul.f32 %v1315, %v1380
  %v1396 = vmul.f32 %v1316, %v1380
  %v1397 = vmul.f32 %v1317, %v1380
  %v1398 = vld [vmem:[%s6] sm:$0x1]
  %v1400 = vlaneseq
  %v1401 = vshrl.u32 %v1400, 7
  %v1402 = vsub.s32 0, %v1401
  %v1403 = vrot.slane %v1398, %v1402
  %v1405 = vadd.f32 %v1382, %v1403
  %v1406 = vadd.f32 %v1383, %v1403
  %v1407 = vadd.f32 %v1384, %v1403
  %v1408 = vadd.f32 %v1385, %v1403
  %v1409 = vadd.f32 %v1386, %v1403
  %v1410 = vadd.f32 %v1387, %v1403
  %v1411 = vadd.f32 %v1388, %v1403
  %v1412 = vadd.f32 %v1389, %v1403
  %v1413 = vadd.f32 %v1390, %v1403
  %v1414 = vadd.f32 %v1391, %v1403
  %v1415 = vadd.f32 %v1392, %v1403
  %v1416 = vadd.f32 %v1393, %v1403
  %v1417 = vadd.f32 %v1394, %v1403
  %v1418 = vadd.f32 %v1395, %v1403
  %v1419 = vadd.f32 %v1396, %v1403
  %v1420 = vadd.f32 %v1397, %v1403
  %v1421 = vmax.f32 %v1405, 0.0
  %v1422 = vmax.f32 %v1406, 0.0
  %v1423 = vmax.f32 %v1407, 0.0
  %v1424 = vmax.f32 %v1408, 0.0
  %v1425 = vmax.f32 %v1409, 0.0
  %v1426 = vmax.f32 %v1410, 0.0
  %v1427 = vmax.f32 %v1411, 0.0
  %v1428 = vmax.f32 %v1412, 0.0
  %v1429 = vmax.f32 %v1413, 0.0
  %v1430 = vmax.f32 %v1414, 0.0
  %v1431 = vmax.f32 %v1415, 0.0
  %v1432 = vmax.f32 %v1416, 0.0
  %v1433 = vmax.f32 %v1417, 0.0
  %v1434 = vmax.f32 %v1418, 0.0
  %v1435 = vmax.f32 %v1419, 0.0
  %v1436 = vmax.f32 %v1420, 0.0
  %1453 = vrot.lane.b32.xlu0 %v1421, 8
  %v1454 = vpop.permute.xlu0 %1453
  %1455 = vrot.lane.b32.xlu0 %v1422, 8
  %v1456 = vpop.permute.xlu0 %1455
  %1457 = vrot.lane.b32.xlu0 %v1423, 8
  %v1458 = vpop.permute.xlu0 %1457
  %1459 = vrot.lane.b32.xlu0 %v1424, 8
  %v1460 = vpop.permute.xlu0 %1459
  %1461 = vrot.lane.b32.xlu0 %v1425, 8
  %v1462 = vpop.permute.xlu0 %1461
  %1463 = vrot.lane.b32.xlu0 %v1426, 8
  %v1464 = vpop.permute.xlu0 %1463
  %1465 = vrot.lane.b32.xlu0 %v1427, 8
  %v1466 = vpop.permute.xlu0 %1465
  %1467 = vrot.lane.b32.xlu0 %v1428, 8
  %v1468 = vpop.permute.xlu0 %1467
  %1469 = vrot.lane.b32.xlu0 %v1429, 8
  %v1470 = vpop.permute.xlu0 %1469
  %1471 = vrot.lane.b32.xlu0 %v1430, 8
  %v1472 = vpop.permute.xlu0 %1471
  %1473 = vrot.lane.b32.xlu0 %v1431, 8
  %v1474 = vpop.permute.xlu0 %1473
  %1475 = vrot.lane.b32.xlu0 %v1432, 8
  %v1476 = vpop.permute.xlu0 %1475
  %1477 = vrot.lane.b32.xlu0 %v1433, 8
  %v1478 = vpop.permute.xlu0 %1477
  %1479 = vrot.lane.b32.xlu0 %v1434, 8
  %v1480 = vpop.permute.xlu0 %1479
  %1481 = vrot.lane.b32.xlu0 %v1435, 8
  %v1482 = vpop.permute.xlu0 %1481
  %1483 = vrot.lane.b32.xlu0 %v1436, 8
  %v1484 = vpop.permute.xlu0 %1483
  %v1501 = vadd.f32 %v174, %v1454
  %v1502 = vadd.f32 %v177, %v1456
  %v1503 = vadd.f32 %v182, %v1458
  %v1504 = vadd.f32 %v185, %v1460
  %v1505 = vadd.f32 %v190, %v1462
  %v1506 = vadd.f32 %v193, %v1464
  %v1507 = vadd.f32 %v198, %v1466
  %v1508 = vadd.f32 %v201, %v1468
  %v1509 = vadd.f32 %v206, %v1470
  %v1510 = vadd.f32 %v209, %v1472
  %v1511 = vadd.f32 %v214, %v1474
  %v1512 = vadd.f32 %v217, %v1476
  %v1513 = vadd.f32 %v222, %v1478
  %v1514 = vadd.f32 %v225, %v1480
  %v1515 = vadd.f32 %v230, %v1482
  %v1516 = vadd.f32 %v233, %v1484
  %1533 = vrot.lane.b32.xlu0 %v1501, 120
  %v1534 = vpop.permute.xlu0 %1533
  %1535 = vrot.lane.b32.xlu0 %v1502, 120
  %v1536 = vpop.permute.xlu0 %1535
  %1537 = vrot.lane.b32.xlu0 %v1503, 120
  %v1538 = vpop.permute.xlu0 %1537
  %1539 = vrot.lane.b32.xlu0 %v1504, 120
  %v1540 = vpop.permute.xlu0 %1539
  %1541 = vrot.lane.b32.xlu0 %v1505, 120
  %v1542 = vpop.permute.xlu0 %1541
  %1543 = vrot.lane.b32.xlu0 %v1506, 120
  %v1544 = vpop.permute.xlu0 %1543
  %1545 = vrot.lane.b32.xlu0 %v1507, 120
  %v1546 = vpop.permute.xlu0 %1545
  %1547 = vrot.lane.b32.xlu0 %v1508, 120
  %v1548 = vpop.permute.xlu0 %1547
  %1549 = vrot.lane.b32.xlu0 %v1509, 120
  %v1550 = vpop.permute.xlu0 %1549
  %1551 = vrot.lane.b32.xlu0 %v1510, 120
  %v1552 = vpop.permute.xlu0 %1551
  %1553 = vrot.lane.b32.xlu0 %v1511, 120
  %v1554 = vpop.permute.xlu0 %1553
  %1555 = vrot.lane.b32.xlu0 %v1512, 120
  %v1556 = vpop.permute.xlu0 %1555
  %1557 = vrot.lane.b32.xlu0 %v1513, 120
  %v1558 = vpop.permute.xlu0 %1557
  %1559 = vrot.lane.b32.xlu0 %v1514, 120
  %v1560 = vpop.permute.xlu0 %1559
  %1561 = vrot.lane.b32.xlu0 %v1515, 120
  %v1562 = vpop.permute.xlu0 %1561
  %1563 = vrot.lane.b32.xlu0 %v1516, 120
  %v1564 = vpop.permute.xlu0 %1563
  %1581 = vst.msk [vmem:[%s7] sm:$0xff] %vm236, %v1534
  %1582 = vst.msk [vmem:[%s7 + $0x8] sm:$0xff] %vm236, %v1536
  %1583 = vst.msk [vmem:[%s7 + $0x10] sm:$0xff] %vm236, %v1538
  %1584 = vst.msk [vmem:[%s7 + $0x18] sm:$0xff] %vm236, %v1540
  %1585 = vst.msk [vmem:[%s7 + $0x20] sm:$0xff] %vm236, %v1542
  %1586 = vst.msk [vmem:[%s7 + $0x28] sm:$0xff] %vm236, %v1544
  %1587 = vst.msk [vmem:[%s7 + $0x30] sm:$0xff] %vm236, %v1546
  %1588 = vst.msk [vmem:[%s7 + $0x38] sm:$0xff] %vm236, %v1548
  %1589 = vst.msk [vmem:[%s7 + $0x40] sm:$0xff] %vm236, %v1550
  %1590 = vst.msk [vmem:[%s7 + $0x48] sm:$0xff] %vm236, %v1552
  %1591 = vst.msk [vmem:[%s7 + $0x50] sm:$0xff] %vm236, %v1554
  %1592 = vst.msk [vmem:[%s7 + $0x58] sm:$0xff] %vm236, %v1556
  %1593 = vst.msk [vmem:[%s7 + $0x60] sm:$0xff] %vm236, %v1558
  %1594 = vst.msk [vmem:[%s7 + $0x68] sm:$0xff] %vm236, %v1560
  %1595 = vst.msk [vmem:[%s7 + $0x70] sm:$0xff] %vm236, %v1562
  %1596 = vst.msk [vmem:[%s7 + $0x78] sm:$0xff] %vm236, %v1564
  // Predicated region
  $region30: #{down_block_forward.1} parent=0 // pred_check
    _
  $region31: #{down_block_forward.1} parent=0 // pred_check_branch
    %1598 = sbr.rel (0) target = $region33
  $region32: #{down_block_forward.1} parent=0 // pred_region
    _
  $region33: #{down_block_forward.1} parent=0 // pred_fallthru
    _
  // Predicated region
  $region34: #{down_block_forward.1} parent=0 // pred_check
    _
  $region35: #{down_block_forward.1} parent=0 // pred_check_branch
    %1600 = sbr.rel (0) target = $region37
  $region36: #{down_block_forward.1} parent=0 // pred_region
    _
  $region37: #{down_block_forward.1} parent=0 // pred_fallthru
    _

</llo_original>
